<compile_context>
chip_gen: v7x
topology: tpu7x:2x2x1
jax: 0.10.0
libtpu: 0.0.40
codegen_flags: <defaults>
</compile_context>

<pallas_src>
import functools

import numpy as np
import jax
import jax.numpy as jnp
from jax import lax
from jax.experimental import pallas as pl
from jax.experimental.pallas import tpu as pltpu

# ----------------------------------------------------------------------------
# Architecture constants.
# ----------------------------------------------------------------------------
KERNEL_SIZE = [(3, 3), (3, 3), (3, 3)]
STRIDE = [(1, 1), (1, 1), (1, 1)]
CHANNELS = [1, 2, 4, 8]          # in_ch -> conv1 -> conv2 -> conv3
NUM_CLASSES = 2
NUM_CONV_LAYERS = 3
IN_H = IN_W = 28


def _align8(x):
    return ((x + 7) // 8) * 8


# ----------------------------------------------------------------------------
# Static plan: per-layer geometry, per-image block heights, packed-slab layout.
# ----------------------------------------------------------------------------
def _build_plan():
    h, w, cin = IN_H, IN_W, CHANNELS[0]
    geoms = []
    for l in range(NUM_CONV_LAYERS):
        kh, kw = KERNEL_SIZE[l]
        sh, sw = STRIDE[l]
        assert sh == 1, "row stride must be 1 for the phase-sliced conv path"
        cout = CHANNELS[l + 1]
        oh = (h - kh) // sh + 1
        ow = (w - kw) // sw + 1
        ph, pw = oh // 2, ow // 2
        geoms.append(dict(kh=kh, kw=kw, sw=sw, cin=cin, cout=cout,
                          h_in=h, w_in=w, oh=oh, ow=ow, ph=ph, pw=pw,
                          in_width=w * cin, drop=kh - 1))
        h, w, cin = ph, pw, cout
    # Flatten-order equivalence with PyTorch's (C,H,W) flatten relies on this:
    assert h == 1 and w == 1, "final spatial size must be 1x1 for the Linear layer"

    # Per-image block heights B_l with B_{l+1} = B_l / 2.  Chosen so every layer's
    # valid rows (+ the trailing rows we drop to stay in bounds) fit in its block.
    nl = NUM_CONV_LAYERS
    req = geoms[0]["h_in"]
    for l in range(1, nl):
        req = max(req, (geoms[l]["h_in"] + geoms[l - 1]["drop"]) * (2 ** l))
    if nl > 1:
        req = max(req, (geoms[nl - 1]["kh"] + geoms[nl - 2]["drop"] + 1) * (2 ** (nl - 1)))
    b0 = _align8(req)
    while b0 % (2 ** (nl - 1)):
        b0 += 8
    block_h = [b0 // (2 ** l) for l in range(nl)]           # e.g. [32, 16, 8]

    # Packed-parameter slab layout: one f32 operand, 8-row-aligned sub-blocks.
    off, cols = 0, NUM_CLASSES
    layers = []
    for g in geoms:
        band_rows = g["kh"] * g["w_in"] * g["cin"]
        band_cols = g["ow"] * g["cout"]
        sel_rows, sel_cols = band_cols, g["pw"] * g["cout"]
        e = dict(g)
        e.update(band_off=off, band_rows=band_rows, band_cols=band_cols)
        off = _align8(off + band_rows)
        e.update(bias_off=off)
        off = _align8(off + 1)
        e.update(ce_off=off, sel_rows=sel_rows, sel_cols=sel_cols)
        off = _align8(off + sel_rows)
        e.update(co_off=off)
        off = _align8(off + sel_rows)
        cols = max(cols, band_cols, sel_cols)
        layers.append(e)
    feat_dim = CHANNELS[-1]
    fc_w_off = off
    off = _align8(off + feat_dim)
    fc_b_off = off
    off = _align8(off + 1)
    return dict(layers=layers, block_h=block_h, packed_shape=(off, cols),
                fc_w_off=fc_w_off, fc_b_off=fc_b_off, feat_dim=feat_dim)


PLAN = _build_plan()


# ----------------------------------------------------------------------------
# Parameter preprocessing (runs ONCE per parameter set — cache the result).
# ----------------------------------------------------------------------------
def _fused_band(w_hwio, w_in, sw):
    """Stacked banded weights: maps the lane-concat of kh shifted input-row slabs
    ((kh*W_in*Cin,) each row) to the conv output row (OW*Cout,)."""
    kh, kw, ci, co = w_hwio.shape
    ow = (w_in - kw) // sw + 1
    ows = jnp.arange(ow)
    taps = []
    for di in range(kh):
        b4 = jnp.zeros((w_in, ci, ow, co), jnp.float32)
        for dj in range(kw):
            val = jnp.broadcast_to(w_hwio[di, dj].astype(jnp.float32), (ow, ci, co))
            b4 = b4.at[ows * sw + dj, :, ows, :].set(val)
        taps.append(b4.reshape(w_in * ci, ow * co))
    return jnp.concatenate(taps, axis=0)                     # (kh*W_in*Cin, OW*Cout)


def _col_pool_mats(ow, cout):
    """Exact 0/1 matrices implementing the 1x2 (column) half of MaxPool2d(2)."""
    pw = ow // 2
    c = np.arange(pw)
    se = np.zeros((ow, pw), np.float32)
    so = np.zeros((ow, pw), np.float32)
    se[2 * c, c] = 1.0
    so[2 * c + 1, c] = 1.0
    eye = np.eye(cout, dtype=np.float32)
    return jnp.asarray(np.kron(se, eye)), jnp.asarray(np.kron(so, eye))


def pack_params(params):
    """Fold conv weights into banded matmul operands + column-pool selection matrices
    and pack everything into ONE padded f32 slab (single kernel operand)."""
    rows, cols = PLAN["packed_shape"]
    slab = jnp.zeros((rows, cols), jnp.float32)
    for l, lp in enumerate(PLAN["layers"]):
        band = _fused_band(params[f"conv{l}_w"], lp["w_in"], lp["sw"])
        bias_row = jnp.tile(params[f"conv{l}_b"].astype(jnp.float32), lp["ow"])
        ce, co = _col_pool_mats(lp["ow"], lp["cout"])
        slab = slab.at[lp["band_off"]:lp["band_off"] + lp["band_rows"],
                       :lp["band_cols"]].set(band)
        slab = slab.at[lp["bias_off"], :lp["band_cols"]].set(bias_row)
        slab = slab.at[lp["ce_off"]:lp["ce_off"] + lp["sel_rows"],
                       :lp["sel_cols"]].set(ce)
        slab = slab.at[lp["co_off"]:lp["co_off"] + lp["sel_rows"],
                       :lp["sel_cols"]].set(co)
    slab = slab.at[PLAN["fc_w_off"]:PLAN["fc_w_off"] + PLAN["feat_dim"],
                   :NUM_CLASSES].set(params["fc_w"].astype(jnp.float32))
    slab = slab.at[PLAN["fc_b_off"], :NUM_CLASSES].set(params["fc_b"].astype(jnp.float32))
    return slab


# ----------------------------------------------------------------------------
# The fused kernel: one grid step = TB images, all activations VMEM-resident.
# ----------------------------------------------------------------------------
def _make_kernel(tb):
    layers = PLAN["layers"]
    block_h = PLAN["block_h"]
    nl = len(layers)

    def kernel(x_ref, p_ref, out_ref, *act_scratch):
        srcs = (x_ref,) + act_scratch            # input slab, then inter-layer scratch
        feat = None
        for l, lp in enumerate(layers):
            src = srcs[l]
            last = (l == nl - 1)
            if last:
                # Only the single valid pooled row per image is computed: output row t
                # reads input rows t*B_l + phase + di  ->  stride = B_l, size = TB.
                m_out, stride = tb, block_h[l]
            else:
                # Output row m = t*B_{l+1} + p reads input rows 2m + phase + di.
                # Dropping the last `drop` (garbage) rows keeps every read in bounds.
                m_out, stride = tb * block_h[l + 1] - lp["drop"], 2

            band = p_ref[lp["band_off"]:lp["band_off"] + lp["band_rows"],
                         0:lp["band_cols"]]
            bias = p_ref[lp["bias_off"]:lp["bias_off"] + 1, 0:lp["band_cols"]]
            ce = p_ref[lp["ce_off"]:lp["ce_off"] + lp["sel_rows"], 0:lp["sel_cols"]]
            co = p_ref[lp["co_off"]:lp["co_off"] + lp["sel_rows"], 0:lp["sel_cols"]]

            # Conv: one matmul per pooling phase; kh vertical taps fused along lanes.
            phase_conv = []
            for phase in range(2):
                parts = [src[pl.ds(phase + di, m_out, stride=stride), :]
                         for di in range(lp["kh"])]
                lhs = parts[0] if lp["kh"] == 1 else jnp.concatenate(parts, axis=1)
                phase_conv.append(
                    jnp.dot(lhs, band, preferred_element_type=jnp.float32))

            act = jnp.maximum(phase_conv[0], phase_conv[1])      # 2x1 row pool
            act = jnp.maximum(act + bias, 0.0)                   # bias + ReLU
            pooled = jnp.maximum(                                # 1x2 column pool
                jnp.dot(act, ce, preferred_element_type=jnp.float32),
                jnp.dot(act, co, preferred_element_type=jnp.float32))

            if last:
                feat = pooled                                    # (TB, feat_dim)
            else:
                act_scratch[l][...] = pooled                     # next layer's input

        # Final Linear(8 -> 2), fused into the same kernel.
        fcw = p_ref[PLAN["fc_w_off"]:PLAN["fc_w_off"] + PLAN["feat_dim"], 0:NUM_CLASSES]
        fcb = p_ref[PLAN["fc_b_off"]:PLAN["fc_b_off"] + 1, 0:NUM_CLASSES]
        out_ref[...] = (jnp.dot(feat, fcw, preferred_element_type=jnp.float32)
                        + fcb).astype(out_ref.dtype)

    return kernel


# ----------------------------------------------------------------------------
# Forward pass: one fused pallas_call, gridded over batch blocks of TB images.
# ----------------------------------------------------------------------------
@functools.partial(jax.jit, static_argnames=("tb",))
def synth_classifier_forward(x_nchw, packed_params, *, tb=8):
    """`packed_params` comes from pack_params(params) (build it once and reuse).
    `tb` = images folded into the matmul M dimension per grid step (multiple of 8;
    use 128-256 for real batches to fill the MXU, keep >= 2 grid steps for v7x)."""
    b, cin, h, w = x_nchw.shape
    assert (h, w, cin) == (IN_H, IN_W, CHANNELS[0])
    assert tb % 8 == 0, "tb must be a multiple of 8 (output block sublane tiling)"
    layers = PLAN["layers"]
    block_h = PLAN["block_h"]
    b0 = block_h[0]

    b_pad = ((b + tb - 1) // tb) * tb
    # NCHW -> NHWC -> channel-fastest row slabs; pad per-image rows to B0 and the
    # batch to a multiple of tb; stack all images along the sublane axis.
    x2d = jnp.transpose(x_nchw, (0, 2, 3, 1)).reshape(b, h, w * cin).astype(jnp.float32)
    x2d = jnp.pad(x2d, ((0, b_pad - b), (0, b0 - h), (0, 0)))
    xs = x2d.reshape(b_pad * b0, w * cin)

    scratch_shapes = [
        pltpu.VMEM((tb * block_h[l + 1] - layers[l]["drop"], layers[l]["sel_cols"]),
                   jnp.float32)
        for l in range(NUM_CONV_LAYERS - 1)
    ]

    out = pl.pallas_call(
        _make_kernel(tb),
        grid=(b_pad // tb,),
        in_specs=[
            pl.BlockSpec((tb * b0, w * cin), lambda i: (i, 0)),
            pl.BlockSpec(PLAN["packed_shape"], lambda i: (0, 0)),   # loaded once
        ],
        out_specs=pl.BlockSpec((tb, NUM_CLASSES), lambda i: (i, 0)),
        out_shape=jax.ShapeDtypeStruct((b_pad, NUM_CLASSES), jnp.float32),
        scratch_shapes=scratch_shapes,
        compiler_params=pltpu.CompilerParams(dimension_semantics=("parallel",)),
    )(xs, packed_params)
    return out[:b]


# ----------------------------------------------------------------------------
# Pure-JAX reference (correctness check of the Pallas path).
# ----------------------------------------------------------------------------
def reference_forward(x_nchw, params):
    x = jnp.transpose(x_nchw, (0, 2, 3, 1)).astype(jnp.float32)
    for layer in range(NUM_CONV_LAYERS):
        w = params[f"conv{layer}_w"]
        b = params[f"conv{layer}_b"]
        x = lax.conv_general_dilated(
            x, w, window_strides=STRIDE[layer], padding="VALID",
            dimension_numbers=("NHWC", "HWIO", "NHWC"))
        x = jnp.maximum(x + b, 0.0)
        x = lax.reduce_window(x, -jnp.inf, lax.max,
                              (1, 2, 2, 1), (1, 2, 2, 1), "VALID")
    feat = x.reshape(x.shape[0], -1)
    return feat @ params["fc_w"] + params["fc_b"]


# ----------------------------------------------------------------------------
# Deterministic parameter initialization (synthetic weights, no checkpoint).
# ----------------------------------------------------------------------------
def init_params(key):
    params = {}
    cin = CHANNELS[0]
    for layer in range(NUM_CONV_LAYERS):
        cout = CHANNELS[layer + 1]
        kh, kw = KERNEL_SIZE[layer]
        key, kw_key, kb_key = jax.random.split(key, 3)
        fan_in = cin * kh * kw
        params[f"conv{layer}_w"] = (
            jax.random.normal(kw_key, (kh, kw, cin, cout), jnp.float32)
            / jnp.sqrt(jnp.float32(fan_in)))
        params[f"conv{layer}_b"] = 0.01 * jax.random.normal(kb_key, (cout,), jnp.float32)
        cin = cout
    key, kw_key, kb_key = jax.random.split(key, 3)
    params["fc_w"] = (jax.random.normal(kw_key, (CHANNELS[-1], NUM_CLASSES), jnp.float32)
                      / jnp.sqrt(jnp.float32(CHANNELS[-1])))
    params["fc_b"] = 0.01 * jax.random.normal(kb_key, (NUM_CLASSES,), jnp.float32)
    return params


if __name__ == "__main__":
    root = jax.random.PRNGKey(0)
    pkey, xkey = jax.random.split(root)
    params = init_params(pkey)
    packed = pack_params(params)       # built ONCE per parameter set (cached by caller)

    # Small deterministic input, PyTorch-style NCHW: (batch=16, channels=1, 28, 28).
    x = jax.random.normal(xkey, (16, 1, 28, 28), jnp.float32)

    logits = jax.block_until_ready(synth_classifier_forward(x, packed, tb=8))
    ref = jax.block_until_ready(reference_forward(x, params))
    assert logits.shape == (16, NUM_CLASSES)
    assert jnp.allclose(logits, ref, rtol=1e-3, atol=1e-3), (logits, ref)

    # Batch that is not a multiple of tb (exercises the padding/slicing path).
    logits2 = jax.block_until_ready(synth_classifier_forward(x[:6], packed, tb=8))
    assert jnp.allclose(logits2, ref[:6], rtol=1e-3, atol=1e-3), (logits2, ref[:6])

    print("KERNEL_OK")
</pallas_src>

<mosaic_0001>
module attributes {stable_mosaic.version = 11 : i64} {
  func.func @kernel(%arg0: i32, %arg1: memref<256x28xf32, #tpu.memory_space<vmem>>, %arg2: memref<528x52xf32, #tpu.memory_space<vmem>>, %arg3: memref<8x2xf32, #tpu.memory_space<vmem>>, %arg4: memref<126x26xf32, #tpu.memory_space<vmem>>, %arg5: memref<62x20xf32, #tpu.memory_space<vmem>>) attributes {dimension_semantics = [#tpu.dimension_semantics<parallel>], iteration_bounds = array<i64: 2>, scalar_prefetch = 0 : i64, scratch_operands = 2 : i64, tpu.core_type = #tpu.core_type<tc>, window_params = [{transform_indices = @transform_0, window_bounds = array<i64: 256, 28>}, {pipeline_mode = #tpu.pipeline_mode<synchronous>, transform_indices = @transform_1, window_bounds = array<i64: 528, 52>}, {transform_indices = @transform_2, window_bounds = array<i64: 8, 2>}]} {
    %c0 = arith.constant 0 : index
    %c0_0 = arith.constant 0 : index
    %0 = vector.load %arg2[%c0, %c0_0] : memref<528x52xf32, #tpu.memory_space<vmem>>, vector<84x52xf32>
    %c88 = arith.constant 88 : index
    %c0_1 = arith.constant 0 : index
    %1 = vector.load %arg2[%c88, %c0_1] : memref<528x52xf32, #tpu.memory_space<vmem>>, vector<1x52xf32>
    %c96 = arith.constant 96 : index
    %c0_2 = arith.constant 0 : index
    %2 = vector.load %arg2[%c96, %c0_2] : memref<528x52xf32, #tpu.memory_space<vmem>>, vector<52x26xf32>
    %c152 = arith.constant 152 : index
    %c0_3 = arith.constant 0 : index
    %3 = vector.load %arg2[%c152, %c0_3] : memref<528x52xf32, #tpu.memory_space<vmem>>, vector<52x26xf32>
    %c0_4 = arith.constant 0 : index
    %c0_5 = arith.constant 0 : index
    %4 = tpu.strided_load %arg1[%c0_4, %c0_5] {strides = array<i32: 2, 1>} : memref<256x28xf32, #tpu.memory_space<vmem>>, vector<126x28xf32>
    %c1 = arith.constant 1 : index
    %c0_6 = arith.constant 0 : index
    %5 = tpu.strided_load %arg1[%c1, %c0_6] {strides = array<i32: 2, 1>} : memref<256x28xf32, #tpu.memory_space<vmem>>, vector<126x28xf32>
    %c2 = arith.constant 2 : index
    %c0_7 = arith.constant 0 : index
    %6 = tpu.strided_load %arg1[%c2, %c0_7] {strides = array<i32: 2, 1>} : memref<256x28xf32, #tpu.memory_space<vmem>>, vector<126x28xf32>
    %7 = tpu.concatenate %4, %5, %6 in 1 : vector<126x28xf32>, vector<126x28xf32>, vector<126x28xf32> -> vector<126x84xf32>
    %cst = arith.constant dense<0.000000e+00> : vector<126x52xf32>
    %8 = tpu.matmul %7, %0, %cst {dimension_numbers = #tpu.dot_dimension_numbers<[1], [0], [0], [1], [0, 0, 1, 1], [], []>} : vector<126x84xf32>, vector<84x52xf32>, vector<126x52xf32> -> vector<126x52xf32>
    %c1_8 = arith.constant 1 : index
    %c0_9 = arith.constant 0 : index
    %9 = tpu.strided_load %arg1[%c1_8, %c0_9] {strides = array<i32: 2, 1>} : memref<256x28xf32, #tpu.memory_space<vmem>>, vector<126x28xf32>
    %c2_10 = arith.constant 2 : index
    %c0_11 = arith.constant 0 : index
    %10 = tpu.strided_load %arg1[%c2_10, %c0_11] {strides = array<i32: 2, 1>} : memref<256x28xf32, #tpu.memory_space<vmem>>, vector<126x28xf32>
    %c3 = arith.constant 3 : index
    %c0_12 = arith.constant 0 : index
    %11 = tpu.strided_load %arg1[%c3, %c0_12] {strides = array<i32: 2, 1>} : memref<256x28xf32, #tpu.memory_space<vmem>>, vector<126x28xf32>
    %12 = tpu.concatenate %9, %10, %11 in 1 : vector<126x28xf32>, vector<126x28xf32>, vector<126x28xf32> -> vector<126x84xf32>
    %cst_13 = arith.constant dense<0.000000e+00> : vector<126x52xf32>
    %13 = tpu.matmul %12, %0, %cst_13 {dimension_numbers = #tpu.dot_dimension_numbers<[1], [0], [0], [1], [0, 0, 1, 1], [], []>} : vector<126x84xf32>, vector<84x52xf32>, vector<126x52xf32> -> vector<126x52xf32>
    %14 = arith.maximumf %8, %13 : vector<126x52xf32>
    %15 = vector.broadcast %1 : vector<1x52xf32> to vector<126x52xf32>
    %16 = arith.addf %14, %15 : vector<126x52xf32>
    %cst_14 = arith.constant 0.000000e+00 : f32
    %17 = vector.broadcast %cst_14 : f32 to vector<126x52xf32>
    %18 = arith.maximumf %16, %17 : vector<126x52xf32>
    %cst_15 = arith.constant dense<0.000000e+00> : vector<126x26xf32>
    %19 = tpu.matmul %18, %2, %cst_15 {dimension_numbers = #tpu.dot_dimension_numbers<[1], [0], [0], [1], [0, 0, 1, 1], [], []>} : vector<126x52xf32>, vector<52x26xf32>, vector<126x26xf32> -> vector<126x26xf32>
    %cst_16 = arith.constant dense<0.000000e+00> : vector<126x26xf32>
    %20 = tpu.matmul %18, %3, %cst_16 {dimension_numbers = #tpu.dot_dimension_numbers<[1], [0], [0], [1], [0, 0, 1, 1], [], []>} : vector<126x52xf32>, vector<52x26xf32>, vector<126x26xf32> -> vector<126x26xf32>
    %21 = arith.maximumf %19, %20 : vector<126x26xf32>
    %c0_17 = arith.constant 0 : index
    %c0_18 = arith.constant 0 : index
    %22 = vector.load %arg4[%c0_17, %c0_18] : memref<126x26xf32, #tpu.memory_space<vmem>>, vector<126x26xf32>
    tpu.vector_store %arg4[%c0_17, %c0_18], %21 {strides = array<i32>} : memref<126x26xf32, #tpu.memory_space<vmem>>, vector<126x26xf32>,
    %c208 = arith.constant 208 : index
    %c0_19 = arith.constant 0 : index
    %23 = vector.load %arg2[%c208, %c0_19] : memref<528x52xf32, #tpu.memory_space<vmem>>, vector<78x44xf32>
    %c288 = arith.constant 288 : index
    %c0_20 = arith.constant 0 : index
    %24 = vector.load %arg2[%c288, %c0_20] : memref<528x52xf32, #tpu.memory_space<vmem>>, vector<1x44xf32>
    %c296 = arith.constant 296 : index
    %c0_21 = arith.constant 0 : index
    %25 = vector.load %arg2[%c296, %c0_21] : memref<528x52xf32, #tpu.memory_space<vmem>>, vector<44x20xf32>
    %c344 = arith.constant 344 : index
    %c0_22 = arith.constant 0 : index
    %26 = vector.load %arg2[%c344, %c0_22] : memref<528x52xf32, #tpu.memory_space<vmem>>, vector<44x20xf32>
    %c0_23 = arith.constant 0 : index
    %c0_24 = arith.constant 0 : index
    %27 = tpu.strided_load %arg4[%c0_23, %c0_24] {strides = array<i32: 2, 1>} : memref<126x26xf32, #tpu.memory_space<vmem>>, vector<62x26xf32>
    %c1_25 = arith.constant 1 : index
    %c0_26 = arith.constant 0 : index
    %28 = tpu.strided_load %arg4[%c1_25, %c0_26] {strides = array<i32: 2, 1>} : memref<126x26xf32, #tpu.memory_space<vmem>>, vector<62x26xf32>
    %c2_27 = arith.constant 2 : index
    %c0_28 = arith.constant 0 : index
    %29 = tpu.strided_load %arg4[%c2_27, %c0_28] {strides = array<i32: 2, 1>} : memref<126x26xf32, #tpu.memory_space<vmem>>, vector<62x26xf32>
    %30 = tpu.concatenate %27, %28, %29 in 1 : vector<62x26xf32>, vector<62x26xf32>, vector<62x26xf32> -> vector<62x78xf32>
    %cst_29 = arith.constant dense<0.000000e+00> : vector<62x44xf32>
    %31 = tpu.matmul %30, %23, %cst_29 {dimension_numbers = #tpu.dot_dimension_numbers<[1], [0], [0], [1], [0, 0, 1, 1], [], []>} : vector<62x78xf32>, vector<78x44xf32>, vector<62x44xf32> -> vector<62x44xf32>
    %c1_30 = arith.constant 1 : index
    %c0_31 = arith.constant 0 : index
    %32 = tpu.strided_load %arg4[%c1_30, %c0_31] {strides = array<i32: 2, 1>} : memref<126x26xf32, #tpu.memory_space<vmem>>, vector<62x26xf32>
    %c2_32 = arith.constant 2 : index
    %c0_33 = arith.constant 0 : index
    %33 = tpu.strided_load %arg4[%c2_32, %c0_33] {strides = array<i32: 2, 1>} : memref<126x26xf32, #tpu.memory_space<vmem>>, vector<62x26xf32>
    %c3_34 = arith.constant 3 : index
    %c0_35 = arith.constant 0 : index
    %34 = tpu.strided_load %arg4[%c3_34, %c0_35] {strides = array<i32: 2, 1>} : memref<126x26xf32, #tpu.memory_space<vmem>>, vector<62x26xf32>
    %35 = tpu.concatenate %32, %33, %34 in 1 : vector<62x26xf32>, vector<62x26xf32>, vector<62x26xf32> -> vector<62x78xf32>
    %cst_36 = arith.constant dense<0.000000e+00> : vector<62x44xf32>
    %36 = tpu.matmul %35, %23, %cst_36 {dimension_numbers = #tpu.dot_dimension_numbers<[1], [0], [0], [1], [0, 0, 1, 1], [], []>} : vector<62x78xf32>, vector<78x44xf32>, vector<62x44xf32> -> vector<62x44xf32>
    %37 = arith.maximumf %31, %36 : vector<62x44xf32>
    %38 = vector.broadcast %24 : vector<1x44xf32> to vector<62x44xf32>
    %39 = arith.addf %37, %38 : vector<62x44xf32>
    %cst_37 = arith.constant 0.000000e+00 : f32
    %40 = vector.broadcast %cst_37 : f32 to vector<62x44xf32>
    %41 = arith.maximumf %39, %40 : vector<62x44xf32>
    %cst_38 = arith.constant dense<0.000000e+00> : vector<62x20xf32>
    %42 = tpu.matmul %41, %25, %cst_38 {dimension_numbers = #tpu.dot_dimension_numbers<[1], [0], [0], [1], [0, 0, 1, 1], [], []>} : vector<62x44xf32>, vector<44x20xf32>, vector<62x20xf32> -> vector<62x20xf32>
    %cst_39 = arith.constant dense<0.000000e+00> : vector<62x20xf32>
    %43 = tpu.matmul %41, %26, %cst_39 {dimension_numbers = #tpu.dot_dimension_numbers<[1], [0], [0], [1], [0, 0, 1, 1], [], []>} : vector<62x44xf32>, vector<44x20xf32>, vector<62x20xf32> -> vector<62x20xf32>
    %44 = arith.maximumf %42, %43 : vector<62x20xf32>
    %c0_40 = arith.constant 0 : index
    %c0_41 = arith.constant 0 : index
    %45 = vector.load %arg5[%c0_40, %c0_41] : memref<62x20xf32, #tpu.memory_space<vmem>>, vector<62x20xf32>
    tpu.vector_store %arg5[%c0_40, %c0_41], %44 {strides = array<i32>} : memref<62x20xf32, #tpu.memory_space<vmem>>, vector<62x20xf32>,
    %c392 = arith.constant 392 : index
    %c0_42 = arith.constant 0 : index
    %46 = vector.load %arg2[%c392, %c0_42] : memref<528x52xf32, #tpu.memory_space<vmem>>, vector<60x24xf32>
    %c456 = arith.constant 456 : index
    %c0_43 = arith.constant 0 : index
    %47 = vector.load %arg2[%c456, %c0_43] : memref<528x52xf32, #tpu.memory_space<vmem>>, vector<1x24xf32>
    %c464 = arith.constant 464 : index
    %c0_44 = arith.constant 0 : index
    %48 = vector.load %arg2[%c464, %c0_44] : memref<528x52xf32, #tpu.memory_space<vmem>>, vector<24x8xf32>
    %c488 = arith.constant 488 : index
    %c0_45 = arith.constant 0 : index
    %49 = vector.load %arg2[%c488, %c0_45] : memref<528x52xf32, #tpu.memory_space<vmem>>, vector<24x8xf32>
    %c0_46 = arith.constant 0 : index
    %c0_47 = arith.constant 0 : index
    %50 = tpu.strided_load %arg5[%c0_46, %c0_47] {strides = array<i32: 8, 1>} : memref<62x20xf32, #tpu.memory_space<vmem>>, vector<8x20xf32>
    %c1_48 = arith.constant 1 : index
    %c0_49 = arith.constant 0 : index
    %51 = tpu.strided_load %arg5[%c1_48, %c0_49] {strides = array<i32: 8, 1>} : memref<62x20xf32, #tpu.memory_space<vmem>>, vector<8x20xf32>
    %c2_50 = arith.constant 2 : index
    %c0_51 = arith.constant 0 : index
    %52 = tpu.strided_load %arg5[%c2_50, %c0_51] {strides = array<i32: 8, 1>} : memref<62x20xf32, #tpu.memory_space<vmem>>, vector<8x20xf32>
    %53 = tpu.concatenate %50, %51, %52 in 1 : vector<8x20xf32>, vector<8x20xf32>, vector<8x20xf32> -> vector<8x60xf32>
    %cst_52 = arith.constant dense<0.000000e+00> : vector<8x24xf32>
    %54 = tpu.matmul %53, %46, %cst_52 {dimension_numbers = #tpu.dot_dimension_numbers<[1], [0], [0], [1], [0, 0, 1, 1], [], []>} : vector<8x60xf32>, vector<60x24xf32>, vector<8x24xf32> -> vector<8x24xf32>
    %c1_53 = arith.constant 1 : index
    %c0_54 = arith.constant 0 : index
    %55 = tpu.strided_load %arg5[%c1_53, %c0_54] {strides = array<i32: 8, 1>} : memref<62x20xf32, #tpu.memory_space<vmem>>, vector<8x20xf32>
    %c2_55 = arith.constant 2 : index
    %c0_56 = arith.constant 0 : index
    %56 = tpu.strided_load %arg5[%c2_55, %c0_56] {strides = array<i32: 8, 1>} : memref<62x20xf32, #tpu.memory_space<vmem>>, vector<8x20xf32>
    %c3_57 = arith.constant 3 : index
    %c0_58 = arith.constant 0 : index
    %57 = tpu.strided_load %arg5[%c3_57, %c0_58] {strides = array<i32: 8, 1>} : memref<62x20xf32, #tpu.memory_space<vmem>>, vector<8x20xf32>
    %58 = tpu.concatenate %55, %56, %57 in 1 : vector<8x20xf32>, vector<8x20xf32>, vector<8x20xf32> -> vector<8x60xf32>
    %cst_59 = arith.constant dense<0.000000e+00> : vector<8x24xf32>
    %59 = tpu.matmul %58, %46, %cst_59 {dimension_numbers = #tpu.dot_dimension_numbers<[1], [0], [0], [1], [0, 0, 1, 1], [], []>} : vector<8x60xf32>, vector<60x24xf32>, vector<8x24xf32> -> vector<8x24xf32>
    %60 = arith.maximumf %54, %59 : vector<8x24xf32>
    %61 = vector.broadcast %47 : vector<1x24xf32> to vector<8x24xf32>
    %62 = arith.addf %60, %61 : vector<8x24xf32>
    %cst_60 = arith.constant 0.000000e+00 : f32
    %63 = vector.broadcast %cst_60 : f32 to vector<8x24xf32>
    %64 = arith.maximumf %62, %63 : vector<8x24xf32>
    %cst_61 = arith.constant dense<0.000000e+00> : vector<8x8xf32>
    %65 = tpu.matmul %64, %48, %cst_61 {dimension_numbers = #tpu.dot_dimension_numbers<[1], [0], [0], [1], [0, 0, 1, 1], [], []>} : vector<8x24xf32>, vector<24x8xf32>, vector<8x8xf32> -> vector<8x8xf32>
    %cst_62 = arith.constant dense<0.000000e+00> : vector<8x8xf32>
    %66 = tpu.matmul %64, %49, %cst_62 {dimension_numbers = #tpu.dot_dimension_numbers<[1], [0], [0], [1], [0, 0, 1, 1], [], []>} : vector<8x24xf32>, vector<24x8xf32>, vector<8x8xf32> -> vector<8x8xf32>
    %67 = arith.maximumf %65, %66 : vector<8x8xf32>
    %c512 = arith.constant 512 : index
    %c0_63 = arith.constant 0 : index
    %68 = vector.load %arg2[%c512, %c0_63] : memref<528x52xf32, #tpu.memory_space<vmem>>, vector<8x2xf32>
    %c520 = arith.constant 520 : index
    %c0_64 = arith.constant 0 : index
    %69 = vector.load %arg2[%c520, %c0_64] : memref<528x52xf32, #tpu.memory_space<vmem>>, vector<1x2xf32>
    %cst_65 = arith.constant dense<0.000000e+00> : vector<8x2xf32>
    %70 = tpu.matmul %67, %68, %cst_65 {dimension_numbers = #tpu.dot_dimension_numbers<[1], [0], [0], [1], [0, 0, 1, 1], [], []>} : vector<8x8xf32>, vector<8x2xf32>, vector<8x2xf32> -> vector<8x2xf32>
    %71 = vector.broadcast %69 : vector<1x2xf32> to vector<8x2xf32>
    %72 = arith.addf %70, %71 : vector<8x2xf32>
    %c0_66 = arith.constant 0 : index
    %c0_67 = arith.constant 0 : index
    %73 = vector.load %arg3[%c0_66, %c0_67] : memref<8x2xf32, #tpu.memory_space<vmem>>, vector<8x2xf32>
    tpu.vector_store %arg3[%c0_66, %c0_67], %72 {strides = array<i32>} : memref<8x2xf32, #tpu.memory_space<vmem>>, vector<8x2xf32>,
    return
  }
  func.func @transform_0(%arg0: i32) -> (i32, i32) {
    %c0_i32 = arith.constant 0 : i32
    %c0_i32_0 = arith.constant 0 : i32
    return %arg0, %c0_i32 : i32, i32
  }
  func.func @transform_1(%arg0: i32) -> (i32, i32) {
    %c0_i32 = arith.constant 0 : i32
    %c0_i32_0 = arith.constant 0 : i32
    %c0_i32_1 = arith.constant 0 : i32
    return %c0_i32, %c0_i32_0 : i32, i32
  }
  func.func @transform_2(%arg0: i32) -> (i32, i32) {
    %c0_i32 = arith.constant 0 : i32
    %c0_i32_0 = arith.constant 0 : i32
    return %arg0, %c0_i32 : i32, i32
  }
}

</mosaic_0001>

<llo_original>
// kernel: synth_classifier_forward.1
$region0: #{synth_classifier_forward.1}
  #allocation0 [shape = 'u32[]', space=smem, size = 0x4, offset = 0x4, fixed_abs, tag = 'smem constant byte address 0x4 - core index']
  #allocation1 [shape = 'u32[144,128]{1,0:T(1,128)}', space=vmem, size = 0x12000, scoped, tag = 'internal scratch']
  #allocation2 [shape = 'f32[126,26]{1,0:T(8,128)}', space=vmem, size = 0x10000, scoped, tag = 'scratch operand']
  #allocation3 [shape = 'f32[62,20]{1,0:T(8,128)}', space=vmem, size = 0x8000, scoped, tag = 'scratch operand']
  %s0 = inlined_call_operand.vmem [shape: f32[512,28], index: 0, kind: input, shape index: {}]
  %s1 = inlined_call_operand.vmem [shape: f32[528,52], index: 1, kind: input, shape index: {}]
  %s2 = inlined_call_operand.vmem [shape: f32[16,2], index: 2, kind: output, shape index: {}]
  %s3 = sld [smem:[#allocation0]]
  $region41: #{synth_classifier_forward.1} parent=0
    _
  %s5 = ssub.s32 1, %s3
  %s6 = scalar_select 0, %s5, %s3
  loop: start=0, step=1, limit=4
  $region2: #{synth_classifier_forward.1} parent=0 // loop_pre_header
    _
  $region3: #{synth_classifier_forward.1} parent=0 // loop_header
    %s8 = sphi 0, %s12
    %p9 = scmp.ge.s32.totalorder %s8, 4
    %s18 = sphi 0, %s20
    %s21 = sphi 0, %s18
    %s22 = sphi 0, %s21
    %s38 = sphi 0, %s22
    %s42 = sphi 0, %s42
    %s44 = sphi 0, %s42
    %s45 = sphi 0, %s44
    %s59 = sphi 0, %s45
    %s65 = sphi 0, %s67
    %s68 = sphi 0, %s65
    %s69 = sphi 0, %s68
    %s85 = sphi 0, %s69
  $region4: #{synth_classifier_forward.1} parent=0 // loop_header_branch
    %11 = sbr.rel (%p9) target = $region8
  $region5: #{synth_classifier_forward.1} parent=0 // loop_body
    %s13 = ssub.s32 %s8, 1
    %s14 = ssub.s32 %s8, 2
    %s15 = sadd.s32 %s8, 1
    %s16 = ssub.s32 %s8, %s15
    %p17 = scmp.eq.s32.totalorder %s16, 0
    %s19 = sadd.s32 %s18, 1
    %s20 = scalar_select %p17, %s18, %s19
    %p23 = pneg %p17
    %p24 = scmp.eq.s32.totalorder %s8, 1
    %p25 = por %p23, %p24
    %p26 = scmp.ne.s32.totalorder %s18, %s21
    %p27 = scmp.eq.s32.totalorder %s8, 0
    %p28 = por %p26, %p27
    %p29 = scmp.ne.s32.totalorder %s18, %s21
    %p30 = scmp.eq.s32.totalorder %s13, 1
    %p31 = por %p29, %p30
    %p32 = scmp.ne.s32.totalorder %s21, %s22
    %p33 = scmp.eq.s32.totalorder %s13, 0
    %p34 = por %p32, %p33
    %p35 = scmp.ne.s32.totalorder %s21, %s22
    %p36 = scmp.eq.s32.totalorder %s14, 1
    %p37 = por %p35, %p36
    %p39 = scmp.ne.s32.totalorder %s22, %s38
    %p40 = scmp.eq.s32.totalorder %s14, 0
    %p41 = por %p39, %p40
    %s43 = sadd.s32 %s42, 1
    %p46 = scmp.eq.s32.totalorder %s8, 1
    %p47 = scmp.ne.s32.totalorder %s42, %s44
    %p48 = scmp.eq.s32.totalorder %s8, 0
    %p49 = por %p47, %p48
    %p50 = scmp.ne.s32.totalorder %s42, %s44
    %p51 = scmp.eq.s32.totalorder %s13, 1
    %p52 = por %p50, %p51
    %p53 = scmp.ne.s32.totalorder %s44, %s45
    %p54 = scmp.eq.s32.totalorder %s13, 0
    %p55 = por %p53, %p54
    %p56 = scmp.ne.s32.totalorder %s44, %s45
    %p57 = scmp.eq.s32.totalorder %s14, 1
    %p58 = por %p56, %p57
    %p60 = scmp.ne.s32.totalorder %s45, %s59
    %p61 = scmp.eq.s32.totalorder %s14, 0
    %p62 = por %p60, %p61
    %s63 = ssub.s32 %s8, %s15
    %p64 = scmp.eq.s32.totalorder %s63, 0
    %s66 = sadd.s32 %s65, 1
    %s67 = scalar_select %p64, %s65, %s66
    %p70 = pneg %p64
    %p71 = scmp.eq.s32.totalorder %s8, 1
    %p72 = por %p70, %p71
    %p73 = scmp.ne.s32.totalorder %s65, %s68
    %p74 = scmp.eq.s32.totalorder %s8, 0
    %p75 = por %p73, %p74
    %p76 = scmp.ne.s32.totalorder %s65, %s68
    %p77 = scmp.eq.s32.totalorder %s13, 1
    %p78 = por %p76, %p77
    %p79 = scmp.ne.s32.totalorder %s68, %s69
    %p80 = scmp.eq.s32.totalorder %s13, 0
    %p81 = por %p79, %p80
    %p82 = scmp.ne.s32.totalorder %s68, %s69
    %p83 = scmp.eq.s32.totalorder %s14, 1
    %p84 = por %p82, %p83
    %p86 = scmp.ne.s32.totalorder %s69, %s85
    %p87 = scmp.eq.s32.totalorder %s14, 0
    %p88 = por %p86, %p87
    %p89 = scmp.le.s32.totalorder 1, %s8
    %p90 = scmp.lt.s32.totalorder %s8, 3
    %p91 = pnand %p89, %p90
    %p92 = pneg %p91
    // Predicated region
    $region9: #{synth_classifier_forward.1} parent=5 // pred_check
      _
    $region10: #{synth_classifier_forward.1} parent=5 // pred_check_branch
      %94 = sbr.rel (%p91) target = $region12
    $region11: #{synth_classifier_forward.1} parent=5 // pred_region
      %s95 = ssub.s32 %s8, 1
      // Predicated region
      $region13: #{synth_classifier_forward.1} parent=11 // pred_check
        %p96 = pneg %p55
      $region14: #{synth_classifier_forward.1} parent=11 // pred_check_branch
        %98 = sbr.rel (%p96) target = $region16
      $region15: #{synth_classifier_forward.1} parent=11 // pred_region
        _
      $region16: #{synth_classifier_forward.1} parent=11 // pred_fallthru
        _
    $region12: #{synth_classifier_forward.1} parent=5 // pred_fallthru
      _
    %p99 = scmp.lt.s32.totalorder %s8, 2
    // Predicated region
    $region17: #{synth_classifier_forward.1} parent=5 // pred_check
      %p100 = pneg %p99
    $region18: #{synth_classifier_forward.1} parent=5 // pred_check_branch
      %102 = sbr.rel (%p100) target = $region20
    $region19: #{synth_classifier_forward.1} parent=5 // pred_region
      // Predicated region
      $region21: #{synth_classifier_forward.1} parent=19 // pred_check
        %p103 = pneg %p28
      $region22: #{synth_classifier_forward.1} parent=19 // pred_check_branch
        %105 = sbr.rel (%p103) target = $region24
      $region23: #{synth_classifier_forward.1} parent=19 // pred_region
        %s106 = smul.u32 32, %s8
        %p107 = scmp.lt.s32.totalorder %s106, 63
        %s108 = scalar_select %p107, %s106, 63
        %s109 = smul.addr %s108, 8
        %s110 = scalar_lea.vmem %s0, %s109
        %s111 = smul.u32 32, %s8
      $region24: #{synth_classifier_forward.1} parent=19 // pred_fallthru
        _
    $region20: #{synth_classifier_forward.1} parent=5 // pred_fallthru
      _
    %p112 = scmp.le.s32.totalorder 1, %s8
    %p113 = scmp.lt.s32.totalorder %s8, 3
    %p114 = pnand %p112, %p113
    %p115 = pneg %p114
    // Predicated region
    $region25: #{synth_classifier_forward.1} parent=5 // pred_check
      _
    $region26: #{synth_classifier_forward.1} parent=5 // pred_check_branch
      %117 = sbr.rel (%p114) target = $region28
    $region27: #{synth_classifier_forward.1} parent=5 // pred_region
      %s118 = ssub.s32 %s8, 1
      %s119 = smul.u32 32, %s13
      %p120 = scmp.lt.s32.totalorder %s119, 63
      %s121 = scalar_select %p120, %s119, 63
      %s122 = smul.addr %s121, 8
      %s123 = scalar_lea.vmem %s0, %s122
      %p124 = pneg %p34
      %p125 = pneg %p31
      %p126 = pneg %p55
      %p127 = pneg %p52
      %p128 = pneg %p81
      %p129 = pneg %p78
      %p130 = scmp.lt.s32.totalorder %s13, 1
      %s131 = scalar_select %p130, %s13, 1
      %s132 = smul.addr %s131, 8
      %s133 = scalar_lea.vmem %s2, %s132
      %s134 = smul.u32 32, %s13
      %p135 = scmp.lt.s32.totalorder %s134, 63
      %s136 = scalar_select %p135, %s134, 63
      %s137 = smul.addr %s136, 8
      %s138 = scalar_lea.vmem %s0, %s137
      %s139 = smul.u32 32, %s13
      %p140 = scmp.lt.s32.totalorder %s13, 1
      %s141 = scalar_select %p140, %s13, 1
      %s142 = smul.addr %s141, 8
      %s143 = scalar_lea.vmem %s2, %s142
      %v144 = vld [vmem:[%s1] sm:$0xff]
      %v145 = vld [vmem:[%s1 + $0x8] sm:$0xff]
      %v146 = vld [vmem:[%s1 + $0x10] sm:$0xff]
      %v147 = vld [vmem:[%s1 + $0x18] sm:$0xff]
      %v148 = vld [vmem:[%s1 + $0x20] sm:$0xff]
      %v149 = vld [vmem:[%s1 + $0x28] sm:$0xff]
      %v150 = vld [vmem:[%s1 + $0x30] sm:$0xff]
      %v151 = vld [vmem:[%s1 + $0x38] sm:$0xff]
      %v152 = vld [vmem:[%s1 + $0x40] sm:$0xff]
      %v153 = vld [vmem:[%s1 + $0x48] sm:$0xff]
      %v154 = vld [vmem:[%s1 + $0x50] sm:$0xf]
      %v155 = vld [vmem:[%s1 + $0x58] sm:$0x1]
      %v156 = vld [vmem:[%s1 + $0x60] sm:$0xff]
      %v157 = vld [vmem:[%s1 + $0x68] sm:$0xff]
      %v158 = vld [vmem:[%s1 + $0x70] sm:$0xff]
      %v159 = vld [vmem:[%s1 + $0x78] sm:$0xff]
      %v160 = vld [vmem:[%s1 + $0x80] sm:$0xff]
      %v161 = vld [vmem:[%s1 + $0x88] sm:$0xff]
      %v162 = vld [vmem:[%s1 + $0x90] sm:$0xf]
      %v163 = vld [vmem:[%s1 + $0x98] sm:$0xff]
      %v164 = vld [vmem:[%s1 + $0xa0] sm:$0xff]
      %v165 = vld [vmem:[%s1 + $0xa8] sm:$0xff]
      %v166 = vld [vmem:[%s1 + $0xb0] sm:$0xff]
      %v167 = vld [vmem:[%s1 + $0xb8] sm:$0xff]
      %v168 = vld [vmem:[%s1 + $0xc0] sm:$0xff]
      %v169 = vld [vmem:[%s1 + $0xc8] sm:$0xf]
      %v170 = vld [vmem:[%s138] ss:$2 sm:$0xff]
      %s171 = scalar_lea.vmem %s138, 16
      %v172 = vld [vmem:[%s171] ss:$2 sm:$0xff]
      %s173 = scalar_lea.vmem %s138, 32
      %v174 = vld [vmem:[%s173] ss:$2 sm:$0xff]
      %s175 = scalar_lea.vmem %s138, 48
      %v176 = vld [vmem:[%s175] ss:$2 sm:$0xff]
      %s177 = scalar_lea.vmem %s138, 64
      %v178 = vld [vmem:[%s177] ss:$2 sm:$0xff]
      %s179 = scalar_lea.vmem %s138, 80
      %v180 = vld [vmem:[%s179] ss:$2 sm:$0xff]
      %s181 = scalar_lea.vmem %s138, 96
      %v182 = vld [vmem:[%s181] ss:$2 sm:$0xff]
      %s183 = scalar_lea.vmem %s138, 112
      %v184 = vld [vmem:[%s183] ss:$2 sm:$0xff]
      %s185 = scalar_lea.vmem %s138, 128
      %v186 = vld [vmem:[%s185] ss:$2 sm:$0xff]
      %s187 = scalar_lea.vmem %s138, 144
      %v188 = vld [vmem:[%s187] ss:$2 sm:$0xff]
      %s189 = scalar_lea.vmem %s138, 160
      %v190 = vld [vmem:[%s189] ss:$2 sm:$0xff]
      %s191 = scalar_lea.vmem %s138, 176
      %v192 = vld [vmem:[%s191] ss:$2 sm:$0xff]
      %s193 = scalar_lea.vmem %s138, 192
      %v194 = vld [vmem:[%s193] ss:$2 sm:$0xff]
      %s195 = scalar_lea.vmem %s138, 208
      %v196 = vld [vmem:[%s195] ss:$2 sm:$0xff]
      %s197 = scalar_lea.vmem %s138, 224
      %v198 = vld [vmem:[%s197] ss:$2 sm:$0xff]
      %s199 = scalar_lea.vmem %s138, 240
      %v200 = vld [vmem:[%s199] ss:$2 sm:$0x3f]
      %s201 = scalar_lea.vmem %s138, 1
      %v202 = vld [vmem:[%s201] ss:$2 sm:$0xff]
      %s203 = scalar_lea.vmem %s138, 17
      %v204 = vld [vmem:[%s203] ss:$2 sm:$0xff]
      %s205 = scalar_lea.vmem %s138, 33
      %v206 = vld [vmem:[%s205] ss:$2 sm:$0xff]
      %s207 = scalar_lea.vmem %s138, 49
      %v208 = vld [vmem:[%s207] ss:$2 sm:$0xff]
      %s209 = scalar_lea.vmem %s138, 65
      %v210 = vld [vmem:[%s209] ss:$2 sm:$0xff]
      %s211 = scalar_lea.vmem %s138, 81
      %v212 = vld [vmem:[%s211] ss:$2 sm:$0xff]
      %s213 = scalar_lea.vmem %s138, 97
      %v214 = vld [vmem:[%s213] ss:$2 sm:$0xff]
      %s215 = scalar_lea.vmem %s138, 113
      %v216 = vld [vmem:[%s215] ss:$2 sm:$0xff]
      %s217 = scalar_lea.vmem %s138, 129
      %v218 = vld [vmem:[%s217] ss:$2 sm:$0xff]
      %s219 = scalar_lea.vmem %s138, 145
      %v220 = vld [vmem:[%s219] ss:$2 sm:$0xff]
      %s221 = scalar_lea.vmem %s138, 161
      %v222 = vld [vmem:[%s221] ss:$2 sm:$0xff]
      %s223 = scalar_lea.vmem %s138, 177
      %v224 = vld [vmem:[%s223] ss:$2 sm:$0xff]
      %s225 = scalar_lea.vmem %s138, 193
      %v226 = vld [vmem:[%s225] ss:$2 sm:$0xff]
      %s227 = scalar_lea.vmem %s138, 209
      %v228 = vld [vmem:[%s227] ss:$2 sm:$0xff]
      %s229 = scalar_lea.vmem %s138, 225
      %v230 = vld [vmem:[%s229] ss:$2 sm:$0xff]
      %s231 = scalar_lea.vmem %s138, 241
      %v232 = vld [vmem:[%s231] ss:$2 sm:$0x3f]
      %s233 = scalar_lea.vmem %s138, 2
      %v234 = vld [vmem:[%s233] ss:$2 sm:$0xff]
      %s235 = scalar_lea.vmem %s138, 18
      %v236 = vld [vmem:[%s235] ss:$2 sm:$0xff]
      %s237 = scalar_lea.vmem %s138, 34
      %v238 = vld [vmem:[%s237] ss:$2 sm:$0xff]
      %s239 = scalar_lea.vmem %s138, 50
      %v240 = vld [vmem:[%s239] ss:$2 sm:$0xff]
      %s241 = scalar_lea.vmem %s138, 66
      %v242 = vld [vmem:[%s241] ss:$2 sm:$0xff]
      %s243 = scalar_lea.vmem %s138, 82
      %v244 = vld [vmem:[%s243] ss:$2 sm:$0xff]
      %s245 = scalar_lea.vmem %s138, 98
      %v246 = vld [vmem:[%s245] ss:$2 sm:$0xff]
      %s247 = scalar_lea.vmem %s138, 114
      %v248 = vld [vmem:[%s247] ss:$2 sm:$0xff]
      %s249 = scalar_lea.vmem %s138, 130
      %v250 = vld [vmem:[%s249] ss:$2 sm:$0xff]
      %s251 = scalar_lea.vmem %s138, 146
      %v252 = vld [vmem:[%s251] ss:$2 sm:$0xff]
      %s253 = scalar_lea.vmem %s138, 162
      %v254 = vld [vmem:[%s253] ss:$2 sm:$0xff]
      %s255 = scalar_lea.vmem %s138, 178
      %v256 = vld [vmem:[%s255] ss:$2 sm:$0xff]
      %s257 = scalar_lea.vmem %s138, 194
      %v258 = vld [vmem:[%s257] ss:$2 sm:$0xff]
      %s259 = scalar_lea.vmem %s138, 210
      %v260 = vld [vmem:[%s259] ss:$2 sm:$0xff]
      %s261 = scalar_lea.vmem %s138, 226
      %v262 = vld [vmem:[%s261] ss:$2 sm:$0xff]
      %s263 = scalar_lea.vmem %s138, 242
      %v264 = vld [vmem:[%s263] ss:$2 sm:$0x3f]
      %281 = vrot.lane.b32.xlu0 %v202, 28
      %v282 = vpop.permute.xlu0 %281
      %283 = vrot.lane.b32.xlu0 %v204, 28
      %v284 = vpop.permute.xlu0 %283
      %285 = vrot.lane.b32.xlu0 %v206, 28
      %v286 = vpop.permute.xlu0 %285
      %287 = vrot.lane.b32.xlu0 %v208, 28
      %v288 = vpop.permute.xlu0 %287
      %289 = vrot.lane.b32.xlu0 %v210, 28
      %v290 = vpop.permute.xlu0 %289
      %291 = vrot.lane.b32.xlu0 %v212, 28
      %v292 = vpop.permute.xlu0 %291
      %293 = vrot.lane.b32.xlu0 %v214, 28
      %v294 = vpop.permute.xlu0 %293
      %295 = vrot.lane.b32.xlu0 %v216, 28
      %v296 = vpop.permute.xlu0 %295
      %297 = vrot.lane.b32.xlu0 %v218, 28
      %v298 = vpop.permute.xlu0 %297
      %299 = vrot.lane.b32.xlu0 %v220, 28
      %v300 = vpop.permute.xlu0 %299
      %301 = vrot.lane.b32.xlu0 %v222, 28
      %v302 = vpop.permute.xlu0 %301
      %303 = vrot.lane.b32.xlu0 %v224, 28
      %v304 = vpop.permute.xlu0 %303
      %305 = vrot.lane.b32.xlu0 %v226, 28
      %v306 = vpop.permute.xlu0 %305
      %307 = vrot.lane.b32.xlu0 %v228, 28
      %v308 = vpop.permute.xlu0 %307
      %309 = vrot.lane.b32.xlu0 %v230, 28
      %v310 = vpop.permute.xlu0 %309
      %311 = vrot.lane.b32.xlu0 %v232, 28
      %v312 = vpop.permute.xlu0 %311
      %345 = vrot.lane.b32.xlu0 %v234, 56
      %v346 = vpop.permute.xlu0 %345
      %347 = vrot.lane.b32.xlu0 %v236, 56
      %v348 = vpop.permute.xlu0 %347
      %349 = vrot.lane.b32.xlu0 %v238, 56
      %v350 = vpop.permute.xlu0 %349
      %351 = vrot.lane.b32.xlu0 %v240, 56
      %v352 = vpop.permute.xlu0 %351
      %353 = vrot.lane.b32.xlu0 %v242, 56
      %v354 = vpop.permute.xlu0 %353
      %355 = vrot.lane.b32.xlu0 %v244, 56
      %v356 = vpop.permute.xlu0 %355
      %357 = vrot.lane.b32.xlu0 %v246, 56
      %v358 = vpop.permute.xlu0 %357
      %359 = vrot.lane.b32.xlu0 %v248, 56
      %v360 = vpop.permute.xlu0 %359
      %361 = vrot.lane.b32.xlu0 %v250, 56
      %v362 = vpop.permute.xlu0 %361
      %363 = vrot.lane.b32.xlu0 %v252, 56
      %v364 = vpop.permute.xlu0 %363
      %365 = vrot.lane.b32.xlu0 %v254, 56
      %v366 = vpop.permute.xlu0 %365
      %367 = vrot.lane.b32.xlu0 %v256, 56
      %v368 = vpop.permute.xlu0 %367
      %369 = vrot.lane.b32.xlu0 %v258, 56
      %v370 = vpop.permute.xlu0 %369
      %371 = vrot.lane.b32.xlu0 %v260, 56
      %v372 = vpop.permute.xlu0 %371
      %373 = vrot.lane.b32.xlu0 %v262, 56
      %v374 = vpop.permute.xlu0 %373
      %375 = vrot.lane.b32.xlu0 %v264, 56
      %v376 = vpop.permute.xlu0 %375
      %vm393 = vcmask 228352
      %v394 = vsel %vm393, %v170, %v282
      %v395 = vsel %vm393, %v172, %v284
      %v396 = vsel %vm393, %v174, %v286
      %v397 = vsel %vm393, %v176, %v288
      %v398 = vsel %vm393, %v178, %v290
      %v399 = vsel %vm393, %v180, %v292
      %v400 = vsel %vm393, %v182, %v294
      %v401 = vsel %vm393, %v184, %v296
      %v402 = vsel %vm393, %v186, %v298
      %v403 = vsel %vm393, %v188, %v300
      %v404 = vsel %vm393, %v190, %v302
      %v405 = vsel %vm393, %v192, %v304
      %v406 = vsel %vm393, %v194, %v306
      %v407 = vsel %vm393, %v196, %v308
      %v408 = vsel %vm393, %v198, %v310
      %v409 = vsel %vm393, %v200, %v312
      %vm410 = vcmask 457728
      %v411 = vsel %vm410, %v394, %v346
      %v412 = vsel %vm410, %v395, %v348
      %v413 = vsel %vm410, %v396, %v350
      %v414 = vsel %vm410, %v397, %v352
      %v415 = vsel %vm410, %v398, %v354
      %v416 = vsel %vm410, %v399, %v356
      %v417 = vsel %vm410, %v400, %v358
      %v418 = vsel %vm410, %v401, %v360
      %v419 = vsel %vm410, %v402, %v362
      %v420 = vsel %vm410, %v403, %v364
      %v421 = vsel %vm410, %v404, %v366
      %v422 = vsel %vm410, %v405, %v368
      %v423 = vsel %vm410, %v406, %v370
      %v424 = vsel %vm410, %v407, %v372
      %v425 = vsel %vm410, %v408, %v374
      %v426 = vsel %vm410, %v409, %v376
      %vm427 = vcmask 687104
      %v429 = vsel %vm427, %v411, 0
      %v432 = vsel %vm427, %v412, 0
      %v435 = vsel %vm427, %v413, 0
      %v438 = vsel %vm427, %v414, 0
      %v441 = vsel %vm427, %v415, 0
      %v444 = vsel %vm427, %v416, 0
      %v447 = vsel %vm427, %v417, 0
      %v450 = vsel %vm427, %v418, 0
      %v453 = vsel %vm427, %v419, 0
      %v456 = vsel %vm427, %v420, 0
      %v459 = vsel %vm427, %v421, 0
      %v462 = vsel %vm427, %v422, 0
      %v465 = vsel %vm427, %v423, 0
      %v468 = vsel %vm427, %v424, 0
      %v471 = vsel %vm427, %v425, 0
      %v474 = vsel %vm427, %v426, 0
      %vm476 = vcmask 1043456
      %v478 = vsel %vm476, %v154, 0
      %480 = vmatprep.subr.mxu0 0.0
      %481 = vmatpush1.msra.mxu0 %v144
      %482 = vmatprep.subr.mxu0 0.0
      %483 = vmatpush1.msra.mxu0 %v145
      %484 = vmatprep.subr.mxu0 0.0
      %485 = vmatpush1.msra.mxu0 %v146
      %486 = vmatprep.subr.mxu0 0.0
      %487 = vmatpush1.msra.mxu0 %v147
      %488 = vmatprep.subr.mxu0 0.0
      %489 = vmatpush1.msra.mxu0 %v148
      %490 = vmatprep.subr.mxu0 0.0
      %491 = vmatpush1.msra.mxu0 %v149
      %492 = vmatprep.subr.mxu0 0.0
      %493 = vmatpush1.msra.mxu0 %v150
      %494 = vmatprep.subr.mxu0 0.0
      %495 = vmatpush1.msra.mxu0 %v151
      %496 = vmatprep.subr.mxu0 0.0
      %497 = vmatpush1.msra.mxu0 %v152
      %498 = vmatprep.subr.mxu0 0.0
      %499 = vmatpush1.msra.mxu0 %v153
      %500 = vmatprep.subr.mxu0 0.0
      %501 = vmatpush1.msra.mxu0 %v478
      %502 = vmatprep.subr.mxu0 0.0
      %503 = vmatpush1.msra.mxu0 0.0
      %504 = vmatprep.subr.mxu0 0.0
      %505 = vmatpush1.msra.mxu0 0.0
      %506 = vmatprep.subr.mxu0 0.0
      %507 = vmatpush1.msra.mxu0 0.0
      %508 = vmatprep.subr.mxu0 0.0
      %509 = vmatpush1.msra.mxu0 0.0
      %510 = vmatprep.subr.mxu0 0.0
      %511 = vmatpush1.msra.mxu0 0.0
      %512 = vmatprep.subr.mxu0 0.0
      %513 = vmatpush1.msra.mxu0 0.0
      %514 = vmatprep.subr.mxu0 0.0
      %515 = vmatpush1.msra.mxu0 0.0
      %516 = vmatprep.subr.mxu0 0.0
      %517 = vmatpush1.msra.mxu0 0.0
      %518 = vmatprep.subr.mxu0 0.0
      %519 = vmatpush1.msra.mxu0 0.0
      %520 = vmatprep.subr.mxu0 0.0
      %521 = vmatpush1.msra.mxu0 0.0
      %522 = vmatprep.subr.mxu0 0.0
      %523 = vmatpush1.msra.mxu0 0.0
      %524 = vmatprep.subr.mxu0 0.0
      %525 = vmatpush1.msra.mxu0 0.0
      %526 = vmatprep.subr.mxu0 0.0
      %527 = vmatpush1.msra.mxu0 0.0
      %528 = vmatprep.subr.mxu0 0.0
      %529 = vmatpush1.msra.mxu0 0.0
      %530 = vmatprep.subr.mxu0 0.0
      %531 = vmatpush1.msra.mxu0 0.0
      %532 = vmatprep.subr.mxu0 0.0
      %533 = vmatpush1.msra.mxu0 0.0
      %534 = vmatprep.subr.mxu0 0.0
      %535 = vmatpush1.msra.mxu0 0.0
      %536 = vmatprep.subr.mxu0 0.0
      %537 = vmatpush1.msra.mxu0 0.0
      %538 = vmatprep.subr.mxu0 0.0
      %539 = vmatpush1.msra.mxu0 0.0
      %540 = vmatprep.subr.mxu0 0.0
      %541 = vmatpush1.msra.mxu0 0.0
      %542 = vmatprep.subr.mxu0 0.0
      %543 = vmatpush1.msra.mxu0 0.0
      %544 = vmatprep.mubr.f32.mxu0 0.0
      %545 = vmatmul.mubr.f32.gmra.mrb[0].mxu0 %v429
      %v546 = vpop.f32.mrb[0].mxu0
      %v547 = vadd.f32 0.0, %v546
      %v548 = vpop.f32.mrb[0].mxu0
      %549 = vmatprep.mubr.f32.mxu0 0.0
      %550 = vmatmul.mubr.f32.gmra.mrb[0].mxu0 %v432
      %v551 = vpop.f32.mrb[0].mxu0
      %v552 = vadd.f32 0.0, %v551
      %v553 = vpop.f32.mrb[0].mxu0
      %554 = vmatprep.mubr.f32.mxu0 0.0
      %555 = vmatmul.mubr.f32.gmra.mrb[0].mxu0 %v435
      %v556 = vpop.f32.mrb[0].mxu0
      %v557 = vadd.f32 0.0, %v556
      %v558 = vpop.f32.mrb[0].mxu0
      %559 = vmatprep.mubr.f32.mxu0 0.0
      %560 = vmatmul.mubr.f32.gmra.mrb[0].mxu0 %v438
      %v561 = vpop.f32.mrb[0].mxu0
      %v562 = vadd.f32 0.0, %v561
      %v563 = vpop.f32.mrb[0].mxu0
      %564 = vmatprep.mubr.f32.mxu0 0.0
      %565 = vmatmul.mubr.f32.gmra.mrb[0].mxu0 %v441
      %v566 = vpop.f32.mrb[0].mxu0
      %v567 = vadd.f32 0.0, %v566
      %v568 = vpop.f32.mrb[0].mxu0
      %569 = vmatprep.mubr.f32.mxu0 0.0
      %570 = vmatmul.mubr.f32.gmra.mrb[0].mxu0 %v444
      %v571 = vpop.f32.mrb[0].mxu0
      %v572 = vadd.f32 0.0, %v571
      %v573 = vpop.f32.mrb[0].mxu0
      %574 = vmatprep.mubr.f32.mxu0 0.0
      %575 = vmatmul.mubr.f32.gmra.mrb[0].mxu0 %v447
      %v576 = vpop.f32.mrb[0].mxu0
      %v577 = vadd.f32 0.0, %v576
      %v578 = vpop.f32.mrb[0].mxu0
      %579 = vmatprep.mubr.f32.mxu0 0.0
      %580 = vmatmul.mubr.f32.gmra.mrb[0].mxu0 %v450
      %v581 = vpop.f32.mrb[0].mxu0
      %v582 = vadd.f32 0.0, %v581
      %v583 = vpop.f32.mrb[0].mxu0
      %584 = vmatprep.mubr.f32.mxu0 0.0
      %585 = vmatmul.mubr.f32.gmra.mrb[0].mxu0 %v453
      %v586 = vpop.f32.mrb[0].mxu0
      %v587 = vadd.f32 0.0, %v586
      %v588 = vpop.f32.mrb[0].mxu0
      %589 = vmatprep.mubr.f32.mxu0 0.0
      %590 = vmatmul.mubr.f32.gmra.mrb[0].mxu0 %v456
      %v591 = vpop.f32.mrb[0].mxu0
      %v592 = vadd.f32 0.0, %v591
      %v593 = vpop.f32.mrb[0].mxu0
      %594 = vmatprep.mubr.f32.mxu0 0.0
      %595 = vmatmul.mubr.f32.gmra.mrb[0].mxu0 %v459
      %v596 = vpop.f32.mrb[0].mxu0
      %v597 = vadd.f32 0.0, %v596
      %v598 = vpop.f32.mrb[0].mxu0
      %599 = vmatprep.mubr.f32.mxu0 0.0
      %600 = vmatmul.mubr.f32.gmra.mrb[0].mxu0 %v462
      %v601 = vpop.f32.mrb[0].mxu0
      %v602 = vadd.f32 0.0, %v601
      %v603 = vpop.f32.mrb[0].mxu0
      %604 = vmatprep.mubr.f32.mxu0 0.0
      %605 = vmatmul.mubr.f32.gmra.mrb[0].mxu0 %v465
      %v606 = vpop.f32.mrb[0].mxu0
      %v607 = vadd.f32 0.0, %v606
      %v608 = vpop.f32.mrb[0].mxu0
      %609 = vmatprep.mubr.f32.mxu0 0.0
      %610 = vmatmul.mubr.f32.gmra.mrb[0].mxu0 %v468
      %v611 = vpop.f32.mrb[0].mxu0
      %v612 = vadd.f32 0.0, %v611
      %v613 = vpop.f32.mrb[0].mxu0
      %614 = vmatprep.mubr.f32.mxu0 0.0
      %615 = vmatmul.mubr.f32.gmra.mrb[0].mxu0 %v471
      %v616 = vpop.f32.mrb[0].mxu0
      %v617 = vadd.f32 0.0, %v616
      %v618 = vpop.f32.mrb[0].mxu0
      %619 = vmatprep.mubr.f32.mxu0 0.0
      %620 = vmatmul.mubr.f32.gmra.mrb[0].mxu0 %v474
      %v621 = vpop.f32.mrb[0].mxu0
      %v622 = vadd.f32 0.0, %v621
      %v623 = vpop.f32.mrb[0].mxu0
      %624 = vdwg.mxu0
      %s625 = scalar_lea.vmem %s138, 3
      %v626 = vld [vmem:[%s625] ss:$2 sm:$0xff]
      %s627 = scalar_lea.vmem %s138, 19
      %v628 = vld [vmem:[%s627] ss:$2 sm:$0xff]
      %s629 = scalar_lea.vmem %s138, 35
      %v630 = vld [vmem:[%s629] ss:$2 sm:$0xff]
      %s631 = scalar_lea.vmem %s138, 51
      %v632 = vld [vmem:[%s631] ss:$2 sm:$0xff]
      %s633 = scalar_lea.vmem %s138, 67
      %v634 = vld [vmem:[%s633] ss:$2 sm:$0xff]
      %s635 = scalar_lea.vmem %s138, 83
      %v636 = vld [vmem:[%s635] ss:$2 sm:$0xff]
      %s637 = scalar_lea.vmem %s138, 99
      %v638 = vld [vmem:[%s637] ss:$2 sm:$0xff]
      %s639 = scalar_lea.vmem %s138, 115
      %v640 = vld [vmem:[%s639] ss:$2 sm:$0xff]
      %s641 = scalar_lea.vmem %s138, 131
      %v642 = vld [vmem:[%s641] ss:$2 sm:$0xff]
      %s643 = scalar_lea.vmem %s138, 147
      %v644 = vld [vmem:[%s643] ss:$2 sm:$0xff]
      %s645 = scalar_lea.vmem %s138, 163
      %v646 = vld [vmem:[%s645] ss:$2 sm:$0xff]
      %s647 = scalar_lea.vmem %s138, 179
      %v648 = vld [vmem:[%s647] ss:$2 sm:$0xff]
      %s649 = scalar_lea.vmem %s138, 195
      %v650 = vld [vmem:[%s649] ss:$2 sm:$0xff]
      %s651 = scalar_lea.vmem %s138, 211
      %v652 = vld [vmem:[%s651] ss:$2 sm:$0xff]
      %s653 = scalar_lea.vmem %s138, 227
      %v654 = vld [vmem:[%s653] ss:$2 sm:$0xff]
      %s655 = scalar_lea.vmem %s138, 243
      %v656 = vld [vmem:[%s655] ss:$2 sm:$0x3f]
      %657 = vrot.lane.b32.xlu0 %v234, 28
      %v658 = vpop.permute.xlu0 %657
      %659 = vrot.lane.b32.xlu0 %v236, 28
      %v660 = vpop.permute.xlu0 %659
      %661 = vrot.lane.b32.xlu0 %v238, 28
      %v662 = vpop.permute.xlu0 %661
      %663 = vrot.lane.b32.xlu0 %v240, 28
      %v664 = vpop.permute.xlu0 %663
      %665 = vrot.lane.b32.xlu0 %v242, 28
      %v666 = vpop.permute.xlu0 %665
      %667 = vrot.lane.b32.xlu0 %v244, 28
      %v668 = vpop.permute.xlu0 %667
      %669 = vrot.lane.b32.xlu0 %v246, 28
      %v670 = vpop.permute.xlu0 %669
      %671 = vrot.lane.b32.xlu0 %v248, 28
      %v672 = vpop.permute.xlu0 %671
      %673 = vrot.lane.b32.xlu0 %v250, 28
      %v674 = vpop.permute.xlu0 %673
      %675 = vrot.lane.b32.xlu0 %v252, 28
      %v676 = vpop.permute.xlu0 %675
      %677 = vrot.lane.b32.xlu0 %v254, 28
      %v678 = vpop.permute.xlu0 %677
      %679 = vrot.lane.b32.xlu0 %v256, 28
      %v680 = vpop.permute.xlu0 %679
      %681 = vrot.lane.b32.xlu0 %v258, 28
      %v682 = vpop.permute.xlu0 %681
      %683 = vrot.lane.b32.xlu0 %v260, 28
      %v684 = vpop.permute.xlu0 %683
      %685 = vrot.lane.b32.xlu0 %v262, 28
      %v686 = vpop.permute.xlu0 %685
      %687 = vrot.lane.b32.xlu0 %v264, 28
      %v688 = vpop.permute.xlu0 %687
      %721 = vrot.lane.b32.xlu0 %v626, 56
      %v722 = vpop.permute.xlu0 %721
      %723 = vrot.lane.b32.xlu0 %v628, 56
      %v724 = vpop.permute.xlu0 %723
      %725 = vrot.lane.b32.xlu0 %v630, 56
      %v726 = vpop.permute.xlu0 %725
      %727 = vrot.lane.b32.xlu0 %v632, 56
      %v728 = vpop.permute.xlu0 %727
      %729 = vrot.lane.b32.xlu0 %v634, 56
      %v730 = vpop.permute.xlu0 %729
      %731 = vrot.lane.b32.xlu0 %v636, 56
      %v732 = vpop.permute.xlu0 %731
      %733 = vrot.lane.b32.xlu0 %v638, 56
      %v734 = vpop.permute.xlu0 %733
      %735 = vrot.lane.b32.xlu0 %v640, 56
      %v736 = vpop.permute.xlu0 %735
      %737 = vrot.lane.b32.xlu0 %v642, 56
      %v738 = vpop.permute.xlu0 %737
      %739 = vrot.lane.b32.xlu0 %v644, 56
      %v740 = vpop.permute.xlu0 %739
      %741 = vrot.lane.b32.xlu0 %v646, 56
      %v742 = vpop.permute.xlu0 %741
      %743 = vrot.lane.b32.xlu0 %v648, 56
      %v744 = vpop.permute.xlu0 %743
      %745 = vrot.lane.b32.xlu0 %v650, 56
      %v746 = vpop.permute.xlu0 %745
      %747 = vrot.lane.b32.xlu0 %v652, 56
      %v748 = vpop.permute.xlu0 %747
      %749 = vrot.lane.b32.xlu0 %v654, 56
      %v750 = vpop.permute.xlu0 %749
      %751 = vrot.lane.b32.xlu0 %v656, 56
      %v752 = vpop.permute.xlu0 %751
      %v769 = vsel %vm393, %v202, %v658
      %v770 = vsel %vm393, %v204, %v660
      %v771 = vsel %vm393, %v206, %v662
      %v772 = vsel %vm393, %v208, %v664
      %v773 = vsel %vm393, %v210, %v666
      %v774 = vsel %vm393, %v212, %v668
      %v775 = vsel %vm393, %v214, %v670
      %v776 = vsel %vm393, %v216, %v672
      %v777 = vsel %vm393, %v218, %v674
      %v778 = vsel %vm393, %v220, %v676
      %v779 = vsel %vm393, %v222, %v678
      %v780 = vsel %vm393, %v224, %v680
      %v781 = vsel %vm393, %v226, %v682
      %v782 = vsel %vm393, %v228, %v684
      %v783 = vsel %vm393, %v230, %v686
      %v784 = vsel %vm393, %v232, %v688
      %v785 = vsel %vm410, %v769, %v722
      %v786 = vsel %vm410, %v770, %v724
      %v787 = vsel %vm410, %v771, %v726
      %v788 = vsel %vm410, %v772, %v728
      %v789 = vsel %vm410, %v773, %v730
      %v790 = vsel %vm410, %v774, %v732
      %v791 = vsel %vm410, %v775, %v734
      %v792 = vsel %vm410, %v776, %v736
      %v793 = vsel %vm410, %v777, %v738
      %v794 = vsel %vm410, %v778, %v740
      %v795 = vsel %vm410, %v779, %v742
      %v796 = vsel %vm410, %v780, %v744
      %v797 = vsel %vm410, %v781, %v746
      %v798 = vsel %vm410, %v782, %v748
      %v799 = vsel %vm410, %v783, %v750
      %v800 = vsel %vm410, %v784, %v752
      %v802 = vsel %vm427, %v785, 0
      %v805 = vsel %vm427, %v786, 0
      %v808 = vsel %vm427, %v787, 0
      %v811 = vsel %vm427, %v788, 0
      %v814 = vsel %vm427, %v789, 0
      %v817 = vsel %vm427, %v790, 0
      %v820 = vsel %vm427, %v791, 0
      %v823 = vsel %vm427, %v792, 0
      %v826 = vsel %vm427, %v793, 0
      %v829 = vsel %vm427, %v794, 0
      %v832 = vsel %vm427, %v795, 0
      %v835 = vsel %vm427, %v796, 0
      %v838 = vsel %vm427, %v797, 0
      %v841 = vsel %vm427, %v798, 0
      %v844 = vsel %vm427, %v799, 0
      %v847 = vsel %vm427, %v800, 0
      %849 = vmatprep.subr.mxu0 0.0
      %850 = vmatpush1.msra.mxu0 %v144
      %851 = vmatprep.subr.mxu0 0.0
      %852 = vmatpush1.msra.mxu0 %v145
      %853 = vmatprep.subr.mxu0 0.0
      %854 = vmatpush1.msra.mxu0 %v146
      %855 = vmatprep.subr.mxu0 0.0
      %856 = vmatpush1.msra.mxu0 %v147
      %857 = vmatprep.subr.mxu0 0.0
      %858 = vmatpush1.msra.mxu0 %v148
      %859 = vmatprep.subr.mxu0 0.0
      %860 = vmatpush1.msra.mxu0 %v149
      %861 = vmatprep.subr.mxu0 0.0
      %862 = vmatpush1.msra.mxu0 %v150
      %863 = vmatprep.subr.mxu0 0.0
      %864 = vmatpush1.msra.mxu0 %v151
      %865 = vmatprep.subr.mxu0 0.0
      %866 = vmatpush1.msra.mxu0 %v152
      %867 = vmatprep.subr.mxu0 0.0
      %868 = vmatpush1.msra.mxu0 %v153
      %869 = vmatprep.subr.mxu0 0.0
      %870 = vmatpush1.msra.mxu0 %v478
      %871 = vmatprep.subr.mxu0 0.0
      %872 = vmatpush1.msra.mxu0 0.0
      %873 = vmatprep.subr.mxu0 0.0
      %874 = vmatpush1.msra.mxu0 0.0
      %875 = vmatprep.subr.mxu0 0.0
      %876 = vmatpush1.msra.mxu0 0.0
      %877 = vmatprep.subr.mxu0 0.0
      %878 = vmatpush1.msra.mxu0 0.0
      %879 = vmatprep.subr.mxu0 0.0
      %880 = vmatpush1.msra.mxu0 0.0
      %881 = vmatprep.subr.mxu0 0.0
      %882 = vmatpush1.msra.mxu0 0.0
      %883 = vmatprep.subr.mxu0 0.0
      %884 = vmatpush1.msra.mxu0 0.0
      %885 = vmatprep.subr.mxu0 0.0
      %886 = vmatpush1.msra.mxu0 0.0
      %887 = vmatprep.subr.mxu0 0.0
      %888 = vmatpush1.msra.mxu0 0.0
      %889 = vmatprep.subr.mxu0 0.0
      %890 = vmatpush1.msra.mxu0 0.0
      %891 = vmatprep.subr.mxu0 0.0
      %892 = vmatpush1.msra.mxu0 0.0
      %893 = vmatprep.subr.mxu0 0.0
      %894 = vmatpush1.msra.mxu0 0.0
      %895 = vmatprep.subr.mxu0 0.0
      %896 = vmatpush1.msra.mxu0 0.0
      %897 = vmatprep.subr.mxu0 0.0
      %898 = vmatpush1.msra.mxu0 0.0
      %899 = vmatprep.subr.mxu0 0.0
      %900 = vmatpush1.msra.mxu0 0.0
      %901 = vmatprep.subr.mxu0 0.0
      %902 = vmatpush1.msra.mxu0 0.0
      %903 = vmatprep.subr.mxu0 0.0
      %904 = vmatpush1.msra.mxu0 0.0
      %905 = vmatprep.subr.mxu0 0.0
      %906 = vmatpush1.msra.mxu0 0.0
      %907 = vmatprep.subr.mxu0 0.0
      %908 = vmatpush1.msra.mxu0 0.0
      %909 = vmatprep.subr.mxu0 0.0
      %910 = vmatpush1.msra.mxu0 0.0
      %911 = vmatprep.subr.mxu0 0.0
      %912 = vmatpush1.msra.mxu0 0.0
      %913 = vmatprep.mubr.f32.mxu0 0.0
      %914 = vmatmul.mubr.f32.gmra.mrb[0].mxu0 %v802
      %v915 = vpop.f32.mrb[0].mxu0
      %v916 = vadd.f32 0.0, %v915
      %v917 = vpop.f32.mrb[0].mxu0
      %918 = vmatprep.mubr.f32.mxu0 0.0
      %919 = vmatmul.mubr.f32.gmra.mrb[0].mxu0 %v805
      %v920 = vpop.f32.mrb[0].mxu0
      %v921 = vadd.f32 0.0, %v920
      %v922 = vpop.f32.mrb[0].mxu0
      %923 = vmatprep.mubr.f32.mxu0 0.0
      %924 = vmatmul.mubr.f32.gmra.mrb[0].mxu0 %v808
      %v925 = vpop.f32.mrb[0].mxu0
      %v926 = vadd.f32 0.0, %v925
      %v927 = vpop.f32.mrb[0].mxu0
      %928 = vmatprep.mubr.f32.mxu0 0.0
      %929 = vmatmul.mubr.f32.gmra.mrb[0].mxu0 %v811
      %v930 = vpop.f32.mrb[0].mxu0
      %v931 = vadd.f32 0.0, %v930
      %v932 = vpop.f32.mrb[0].mxu0
      %933 = vmatprep.mubr.f32.mxu0 0.0
      %934 = vmatmul.mubr.f32.gmra.mrb[0].mxu0 %v814
      %v935 = vpop.f32.mrb[0].mxu0
      %v936 = vadd.f32 0.0, %v935
      %v937 = vpop.f32.mrb[0].mxu0
      %938 = vmatprep.mubr.f32.mxu0 0.0
      %939 = vmatmul.mubr.f32.gmra.mrb[0].mxu0 %v817
      %v940 = vpop.f32.mrb[0].mxu0
      %v941 = vadd.f32 0.0, %v940
      %v942 = vpop.f32.mrb[0].mxu0
      %943 = vmatprep.mubr.f32.mxu0 0.0
      %944 = vmatmul.mubr.f32.gmra.mrb[0].mxu0 %v820
      %v945 = vpop.f32.mrb[0].mxu0
      %v946 = vadd.f32 0.0, %v945
      %v947 = vpop.f32.mrb[0].mxu0
      %948 = vmatprep.mubr.f32.mxu0 0.0
      %949 = vmatmul.mubr.f32.gmra.mrb[0].mxu0 %v823
      %v950 = vpop.f32.mrb[0].mxu0
      %v951 = vadd.f32 0.0, %v950
      %v952 = vpop.f32.mrb[0].mxu0
      %953 = vmatprep.mubr.f32.mxu0 0.0
      %954 = vmatmul.mubr.f32.gmra.mrb[0].mxu0 %v826
      %v955 = vpop.f32.mrb[0].mxu0
      %v956 = vadd.f32 0.0, %v955
      %v957 = vpop.f32.mrb[0].mxu0
      %958 = vmatprep.mubr.f32.mxu0 0.0
      %959 = vmatmul.mubr.f32.gmra.mrb[0].mxu0 %v829
      %v960 = vpop.f32.mrb[0].mxu0
      %v961 = vadd.f32 0.0, %v960
      %v962 = vpop.f32.mrb[0].mxu0
      %963 = vmatprep.mubr.f32.mxu0 0.0
      %964 = vmatmul.mubr.f32.gmra.mrb[0].mxu0 %v832
      %v965 = vpop.f32.mrb[0].mxu0
      %v966 = vadd.f32 0.0, %v965
      %v967 = vpop.f32.mrb[0].mxu0
      %968 = vmatprep.mubr.f32.mxu0 0.0
      %969 = vmatmul.mubr.f32.gmra.mrb[0].mxu0 %v835
      %v970 = vpop.f32.mrb[0].mxu0
      %v971 = vadd.f32 0.0, %v970
      %v972 = vpop.f32.mrb[0].mxu0
      %973 = vmatprep.mubr.f32.mxu0 0.0
      %974 = vmatmul.mubr.f32.gmra.mrb[0].mxu0 %v838
      %v975 = vpop.f32.mrb[0].mxu0
      %v976 = vadd.f32 0.0, %v975
      %v977 = vpop.f32.mrb[0].mxu0
      %978 = vmatprep.mubr.f32.mxu0 0.0
      %979 = vmatmul.mubr.f32.gmra.mrb[0].mxu0 %v841
      %v980 = vpop.f32.mrb[0].mxu0
      %v981 = vadd.f32 0.0, %v980
      %v982 = vpop.f32.mrb[0].mxu0
      %983 = vmatprep.mubr.f32.mxu0 0.0
      %984 = vmatmul.mubr.f32.gmra.mrb[0].mxu0 %v844
      %v985 = vpop.f32.mrb[0].mxu0
      %v986 = vadd.f32 0.0, %v985
      %v987 = vpop.f32.mrb[0].mxu0
      %988 = vmatprep.mubr.f32.mxu0 0.0
      %989 = vmatmul.mubr.f32.gmra.mrb[0].mxu0 %v847
      %v990 = vpop.f32.mrb[0].mxu0
      %v991 = vadd.f32 0.0, %v990
      %v992 = vpop.f32.mrb[0].mxu0
      %993 = vdwg.mxu0
      %v994 = vmax.f32 %v547, %v916
      %v995 = vmax.f32 %v552, %v921
      %v996 = vmax.f32 %v557, %v926
      %v997 = vmax.f32 %v562, %v931
      %v998 = vmax.f32 %v567, %v936
      %v999 = vmax.f32 %v572, %v941
      %v1000 = vmax.f32 %v577, %v946
      %v1001 = vmax.f32 %v582, %v951
      %v1002 = vmax.f32 %v587, %v956
      %v1003 = vmax.f32 %v592, %v961
      %v1004 = vmax.f32 %v597, %v966
      %v1005 = vmax.f32 %v602, %v971
      %v1006 = vmax.f32 %v607, %v976
      %v1007 = vmax.f32 %v612, %v981
      %v1008 = vmax.f32 %v617, %v986
      %v1009 = vmax.f32 %v622, %v991
      %v1010 = vlaneseq
      %v1011 = vshrl.u32 %v1010, 7
      %v1012 = vsub.s32 0, %v1011
      %v1013 = vrot.slane %v155, %v1012
      %v1014 = vadd.f32 %v994, %v1013
      %v1015 = vadd.f32 %v995, %v1013
      %v1016 = vadd.f32 %v996, %v1013
      %v1017 = vadd.f32 %v997, %v1013
      %v1018 = vadd.f32 %v998, %v1013
      %v1019 = vadd.f32 %v999, %v1013
      %v1020 = vadd.f32 %v1000, %v1013
      %v1021 = vadd.f32 %v1001, %v1013
      %v1022 = vadd.f32 %v1002, %v1013
      %v1023 = vadd.f32 %v1003, %v1013
      %v1024 = vadd.f32 %v1004, %v1013
      %v1025 = vadd.f32 %v1005, %v1013
      %v1026 = vadd.f32 %v1006, %v1013
      %v1027 = vadd.f32 %v1007, %v1013
      %v1028 = vadd.f32 %v1008, %v1013
      %v1029 = vadd.f32 %v1009, %v1013
      %v1030 = vmax.f32 %v1014, 0.0
      %v1031 = vmax.f32 %v1015, 0.0
      %v1032 = vmax.f32 %v1016, 0.0
      %v1033 = vmax.f32 %v1017, 0.0
      %v1034 = vmax.f32 %v1018, 0.0
      %v1035 = vmax.f32 %v1019, 0.0
      %v1036 = vmax.f32 %v1020, 0.0
      %v1037 = vmax.f32 %v1021, 0.0
      %v1038 = vmax.f32 %v1022, 0.0
      %v1039 = vmax.f32 %v1023, 0.0
      %v1040 = vmax.f32 %v1024, 0.0
      %v1041 = vmax.f32 %v1025, 0.0
      %v1042 = vmax.f32 %v1026, 0.0
      %v1043 = vmax.f32 %v1027, 0.0
      %v1044 = vmax.f32 %v1028, 0.0
      %v1045 = vmax.f32 %v1029, 0.0
      %vm1046 = vcmask 424960
      %v1048 = vsel %vm1046, %v1030, 0
      %v1051 = vsel %vm1046, %v1031, 0
      %v1054 = vsel %vm1046, %v1032, 0
      %v1057 = vsel %vm1046, %v1033, 0
      %v1060 = vsel %vm1046, %v1034, 0
      %v1063 = vsel %vm1046, %v1035, 0
      %v1066 = vsel %vm1046, %v1036, 0
      %v1069 = vsel %vm1046, %v1037, 0
      %v1072 = vsel %vm1046, %v1038, 0
      %v1075 = vsel %vm1046, %v1039, 0
      %v1078 = vsel %vm1046, %v1040, 0
      %v1081 = vsel %vm1046, %v1041, 0
      %v1084 = vsel %vm1046, %v1042, 0
      %v1087 = vsel %vm1046, %v1043, 0
      %v1090 = vsel %vm1046, %v1044, 0
      %v1093 = vsel %vm1046, %v1045, 0
      %v1096 = vsel %vm476, %v162, 0
      %1098 = vmatprep.subr.mxu0 0.0
      %1099 = vmatpush1.msra.mxu0 %v156
      %1100 = vmatprep.subr.mxu0 0.0
      %1101 = vmatpush1.msra.mxu0 %v157
      %1102 = vmatprep.subr.mxu0 0.0
      %1103 = vmatpush1.msra.mxu0 %v158
      %1104 = vmatprep.subr.mxu0 0.0
      %1105 = vmatpush1.msra.mxu0 %v159
      %1106 = vmatprep.subr.mxu0 0.0
      %1107 = vmatpush1.msra.mxu0 %v160
      %1108 = vmatprep.subr.mxu0 0.0
      %1109 = vmatpush1.msra.mxu0 %v161
      %1110 = vmatprep.subr.mxu0 0.0
      %1111 = vmatpush1.msra.mxu0 %v1096
      %1112 = vmatprep.subr.mxu0 0.0
      %1113 = vmatpush1.msra.mxu0 0.0
      %1114 = vmatprep.subr.mxu0 0.0
      %1115 = vmatpush1.msra.mxu0 0.0
      %1116 = vmatprep.subr.mxu0 0.0
      %1117 = vmatpush1.msra.mxu0 0.0
      %1118 = vmatprep.subr.mxu0 0.0
      %1119 = vmatpush1.msra.mxu0 0.0
      %1120 = vmatprep.subr.mxu0 0.0
      %1121 = vmatpush1.msra.mxu0 0.0
      %1122 = vmatprep.subr.mxu0 0.0
      %1123 = vmatpush1.msra.mxu0 0.0
      %1124 = vmatprep.subr.mxu0 0.0
      %1125 = vmatpush1.msra.mxu0 0.0
      %1126 = vmatprep.subr.mxu0 0.0
      %1127 = vmatpush1.msra.mxu0 0.0
      %1128 = vmatprep.subr.mxu0 0.0
      %1129 = vmatpush1.msra.mxu0 0.0
      %1130 = vmatprep.subr.mxu0 0.0
      %1131 = vmatpush1.msra.mxu0 0.0
      %1132 = vmatprep.subr.mxu0 0.0
      %1133 = vmatpush1.msra.mxu0 0.0
      %1134 = vmatprep.subr.mxu0 0.0
      %1135 = vmatpush1.msra.mxu0 0.0
      %1136 = vmatprep.subr.mxu0 0.0
      %1137 = vmatpush1.msra.mxu0 0.0
      %1138 = vmatprep.subr.mxu0 0.0
      %1139 = vmatpush1.msra.mxu0 0.0
      %1140 = vmatprep.subr.mxu0 0.0
      %1141 = vmatpush1.msra.mxu0 0.0
      %1142 = vmatprep.subr.mxu0 0.0
      %1143 = vmatpush1.msra.mxu0 0.0
      %1144 = vmatprep.subr.mxu0 0.0
      %1145 = vmatpush1.msra.mxu0 0.0
      %1146 = vmatprep.subr.mxu0 0.0
      %1147 = vmatpush1.msra.mxu0 0.0
      %1148 = vmatprep.subr.mxu0 0.0
      %1149 = vmatpush1.msra.mxu0 0.0
      %1150 = vmatprep.subr.mxu0 0.0
      %1151 = vmatpush1.msra.mxu0 0.0
      %1152 = vmatprep.subr.mxu0 0.0
      %1153 = vmatpush1.msra.mxu0 0.0
      %1154 = vmatprep.subr.mxu0 0.0
      %1155 = vmatpush1.msra.mxu0 0.0
      %1156 = vmatprep.subr.mxu0 0.0
      %1157 = vmatpush1.msra.mxu0 0.0
      %1158 = vmatprep.subr.mxu0 0.0
      %1159 = vmatpush1.msra.mxu0 0.0
      %1160 = vmatprep.subr.mxu0 0.0
      %1161 = vmatpush1.msra.mxu0 0.0
      %1162 = vmatprep.mubr.f32.mxu0 0.0
      %1163 = vmatmul.mubr.f32.gmra.mrb[0].mxu0 %v1048
      %v1164 = vpop.f32.mrb[0].mxu0
      %v1165 = vadd.f32 0.0, %v1164
      %v1166 = vpop.f32.mrb[0].mxu0
      %1167 = vmatprep.mubr.f32.mxu0 0.0
      %1168 = vmatmul.mubr.f32.gmra.mrb[0].mxu0 %v1051
      %v1169 = vpop.f32.mrb[0].mxu0
      %v1170 = vadd.f32 0.0, %v1169
      %v1171 = vpop.f32.mrb[0].mxu0
      %1172 = vmatprep.mubr.f32.mxu0 0.0
      %1173 = vmatmul.mubr.f32.gmra.mrb[0].mxu0 %v1054
      %v1174 = vpop.f32.mrb[0].mxu0
      %v1175 = vadd.f32 0.0, %v1174
      %v1176 = vpop.f32.mrb[0].mxu0
      %1177 = vmatprep.mubr.f32.mxu0 0.0
      %1178 = vmatmul.mubr.f32.gmra.mrb[0].mxu0 %v1057
      %v1179 = vpop.f32.mrb[0].mxu0
      %v1180 = vadd.f32 0.0, %v1179
      %v1181 = vpop.f32.mrb[0].mxu0
      %1182 = vmatprep.mubr.f32.mxu0 0.0
      %1183 = vmatmul.mubr.f32.gmra.mrb[0].mxu0 %v1060
      %v1184 = vpop.f32.mrb[0].mxu0
      %v1185 = vadd.f32 0.0, %v1184
      %v1186 = vpop.f32.mrb[0].mxu0
      %1187 = vmatprep.mubr.f32.mxu0 0.0
      %1188 = vmatmul.mubr.f32.gmra.mrb[0].mxu0 %v1063
      %v1189 = vpop.f32.mrb[0].mxu0
      %v1190 = vadd.f32 0.0, %v1189
      %v1191 = vpop.f32.mrb[0].mxu0
      %1192 = vmatprep.mubr.f32.mxu0 0.0
      %1193 = vmatmul.mubr.f32.gmra.mrb[0].mxu0 %v1066
      %v1194 = vpop.f32.mrb[0].mxu0
      %v1195 = vadd.f32 0.0, %v1194
      %v1196 = vpop.f32.mrb[0].mxu0
      %1197 = vmatprep.mubr.f32.mxu0 0.0
      %1198 = vmatmul.mubr.f32.gmra.mrb[0].mxu0 %v1069
      %v1199 = vpop.f32.mrb[0].mxu0
      %v1200 = vadd.f32 0.0, %v1199
      %v1201 = vpop.f32.mrb[0].mxu0
      %1202 = vmatprep.mubr.f32.mxu0 0.0
      %1203 = vmatmul.mubr.f32.gmra.mrb[0].mxu0 %v1072
      %v1204 = vpop.f32.mrb[0].mxu0
      %v1205 = vadd.f32 0.0, %v1204
      %v1206 = vpop.f32.mrb[0].mxu0
      %1207 = vmatprep.mubr.f32.mxu0 0.0
      %1208 = vmatmul.mubr.f32.gmra.mrb[0].mxu0 %v1075
      %v1209 = vpop.f32.mrb[0].mxu0
      %v1210 = vadd.f32 0.0, %v1209
      %v1211 = vpop.f32.mrb[0].mxu0
      %1212 = vmatprep.mubr.f32.mxu0 0.0
      %1213 = vmatmul.mubr.f32.gmra.mrb[0].mxu0 %v1078
      %v1214 = vpop.f32.mrb[0].mxu0
      %v1215 = vadd.f32 0.0, %v1214
      %v1216 = vpop.f32.mrb[0].mxu0
      %1217 = vmatprep.mubr.f32.mxu0 0.0
      %1218 = vmatmul.mubr.f32.gmra.mrb[0].mxu0 %v1081
      %v1219 = vpop.f32.mrb[0].mxu0
      %v1220 = vadd.f32 0.0, %v1219
      %v1221 = vpop.f32.mrb[0].mxu0
      %1222 = vmatprep.mubr.f32.mxu0 0.0
      %1223 = vmatmul.mubr.f32.gmra.mrb[0].mxu0 %v1084
      %v1224 = vpop.f32.mrb[0].mxu0
      %v1225 = vadd.f32 0.0, %v1224
      %v1226 = vpop.f32.mrb[0].mxu0
      %1227 = vmatprep.mubr.f32.mxu0 0.0
      %1228 = vmatmul.mubr.f32.gmra.mrb[0].mxu0 %v1087
      %v1229 = vpop.f32.mrb[0].mxu0
      %v1230 = vadd.f32 0.0, %v1229
      %v1231 = vpop.f32.mrb[0].mxu0
      %1232 = vmatprep.mubr.f32.mxu0 0.0
      %1233 = vmatmul.mubr.f32.gmra.mrb[0].mxu0 %v1090
      %v1234 = vpop.f32.mrb[0].mxu0
      %v1235 = vadd.f32 0.0, %v1234
      %v1236 = vpop.f32.mrb[0].mxu0
      %1237 = vmatprep.mubr.f32.mxu0 0.0
      %1238 = vmatmul.mubr.f32.gmra.mrb[0].mxu0 %v1093
      %v1239 = vpop.f32.mrb[0].mxu0
      %v1240 = vadd.f32 0.0, %v1239
      %v1241 = vpop.f32.mrb[0].mxu0
      %1242 = vdwg.mxu0
      %v1244 = vsel %vm476, %v169, 0
      %1246 = vmatprep.subr.mxu0 0.0
      %1247 = vmatpush1.msra.mxu0 %v163
      %1248 = vmatprep.subr.mxu0 0.0
      %1249 = vmatpush1.msra.mxu0 %v164
      %1250 = vmatprep.subr.mxu0 0.0
      %1251 = vmatpush1.msra.mxu0 %v165
      %1252 = vmatprep.subr.mxu0 0.0
      %1253 = vmatpush1.msra.mxu0 %v166
      %1254 = vmatprep.subr.mxu0 0.0
      %1255 = vmatpush1.msra.mxu0 %v167
      %1256 = vmatprep.subr.mxu0 0.0
      %1257 = vmatpush1.msra.mxu0 %v168
      %1258 = vmatprep.subr.mxu0 0.0
      %1259 = vmatpush1.msra.mxu0 %v1244
      %1260 = vmatprep.subr.mxu0 0.0
      %1261 = vmatpush1.msra.mxu0 0.0
      %1262 = vmatprep.subr.mxu0 0.0
      %1263 = vmatpush1.msra.mxu0 0.0
      %1264 = vmatprep.subr.mxu0 0.0
      %1265 = vmatpush1.msra.mxu0 0.0
      %1266 = vmatprep.subr.mxu0 0.0
      %1267 = vmatpush1.msra.mxu0 0.0
      %1268 = vmatprep.subr.mxu0 0.0
      %1269 = vmatpush1.msra.mxu0 0.0
      %1270 = vmatprep.subr.mxu0 0.0
      %1271 = vmatpush1.msra.mxu0 0.0
      %1272 = vmatprep.subr.mxu0 0.0
      %1273 = vmatpush1.msra.mxu0 0.0
      %1274 = vmatprep.subr.mxu0 0.0
      %1275 = vmatpush1.msra.mxu0 0.0
      %1276 = vmatprep.subr.mxu0 0.0
      %1277 = vmatpush1.msra.mxu0 0.0
      %1278 = vmatprep.subr.mxu0 0.0
      %1279 = vmatpush1.msra.mxu0 0.0
      %1280 = vmatprep.subr.mxu0 0.0
      %1281 = vmatpush1.msra.mxu0 0.0
      %1282 = vmatprep.subr.mxu0 0.0
      %1283 = vmatpush1.msra.mxu0 0.0
      %1284 = vmatprep.subr.mxu0 0.0
      %1285 = vmatpush1.msra.mxu0 0.0
      %1286 = vmatprep.subr.mxu0 0.0
      %1287 = vmatpush1.msra.mxu0 0.0
      %1288 = vmatprep.subr.mxu0 0.0
      %1289 = vmatpush1.msra.mxu0 0.0
      %1290 = vmatprep.subr.mxu0 0.0
      %1291 = vmatpush1.msra.mxu0 0.0
      %1292 = vmatprep.subr.mxu0 0.0
      %1293 = vmatpush1.msra.mxu0 0.0
      %1294 = vmatprep.subr.mxu0 0.0
      %1295 = vmatpush1.msra.mxu0 0.0
      %1296 = vmatprep.subr.mxu0 0.0
      %1297 = vmatpush1.msra.mxu0 0.0
      %1298 = vmatprep.subr.mxu0 0.0
      %1299 = vmatpush1.msra.mxu0 0.0
      %1300 = vmatprep.subr.mxu0 0.0
      %1301 = vmatpush1.msra.mxu0 0.0
      %1302 = vmatprep.subr.mxu0 0.0
      %1303 = vmatpush1.msra.mxu0 0.0
      %1304 = vmatprep.subr.mxu0 0.0
      %1305 = vmatpush1.msra.mxu0 0.0
      %1306 = vmatprep.subr.mxu0 0.0
      %1307 = vmatpush1.msra.mxu0 0.0
      %1308 = vmatprep.subr.mxu0 0.0
      %1309 = vmatpush1.msra.mxu0 0.0
      %1310 = vmatprep.mubr.f32.mxu0 0.0
      %1311 = vmatmul.mubr.f32.gmra.mrb[0].mxu0 %v1048
      %v1312 = vpop.f32.mrb[0].mxu0
      %v1313 = vadd.f32 0.0, %v1312
      %v1314 = vpop.f32.mrb[0].mxu0
      %1315 = vmatprep.mubr.f32.mxu0 0.0
      %1316 = vmatmul.mubr.f32.gmra.mrb[0].mxu0 %v1051
      %v1317 = vpop.f32.mrb[0].mxu0
      %v1318 = vadd.f32 0.0, %v1317
      %v1319 = vpop.f32.mrb[0].mxu0
      %1320 = vmatprep.mubr.f32.mxu0 0.0
      %1321 = vmatmul.mubr.f32.gmra.mrb[0].mxu0 %v1054
      %v1322 = vpop.f32.mrb[0].mxu0
      %v1323 = vadd.f32 0.0, %v1322
      %v1324 = vpop.f32.mrb[0].mxu0
      %1325 = vmatprep.mubr.f32.mxu0 0.0
      %1326 = vmatmul.mubr.f32.gmra.mrb[0].mxu0 %v1057
      %v1327 = vpop.f32.mrb[0].mxu0
      %v1328 = vadd.f32 0.0, %v1327
      %v1329 = vpop.f32.mrb[0].mxu0
      %1330 = vmatprep.mubr.f32.mxu0 0.0
      %1331 = vmatmul.mubr.f32.gmra.mrb[0].mxu0 %v1060
      %v1332 = vpop.f32.mrb[0].mxu0
      %v1333 = vadd.f32 0.0, %v1332
      %v1334 = vpop.f32.mrb[0].mxu0
      %1335 = vmatprep.mubr.f32.mxu0 0.0
      %1336 = vmatmul.mubr.f32.gmra.mrb[0].mxu0 %v1063
      %v1337 = vpop.f32.mrb[0].mxu0
      %v1338 = vadd.f32 0.0, %v1337
      %v1339 = vpop.f32.mrb[0].mxu0
      %1340 = vmatprep.mubr.f32.mxu0 0.0
      %1341 = vmatmul.mubr.f32.gmra.mrb[0].mxu0 %v1066
      %v1342 = vpop.f32.mrb[0].mxu0
      %v1343 = vadd.f32 0.0, %v1342
      %v1344 = vpop.f32.mrb[0].mxu0
      %1345 = vmatprep.mubr.f32.mxu0 0.0
      %1346 = vmatmul.mubr.f32.gmra.mrb[0].mxu0 %v1069
      %v1347 = vpop.f32.mrb[0].mxu0
      %v1348 = vadd.f32 0.0, %v1347
      %v1349 = vpop.f32.mrb[0].mxu0
      %1350 = vmatprep.mubr.f32.mxu0 0.0
      %1351 = vmatmul.mubr.f32.gmra.mrb[0].mxu0 %v1072
      %v1352 = vpop.f32.mrb[0].mxu0
      %v1353 = vadd.f32 0.0, %v1352
      %v1354 = vpop.f32.mrb[0].mxu0
      %1355 = vmatprep.mubr.f32.mxu0 0.0
      %1356 = vmatmul.mubr.f32.gmra.mrb[0].mxu0 %v1075
      %v1357 = vpop.f32.mrb[0].mxu0
      %v1358 = vadd.f32 0.0, %v1357
      %v1359 = vpop.f32.mrb[0].mxu0
      %1360 = vmatprep.mubr.f32.mxu0 0.0
      %1361 = vmatmul.mubr.f32.gmra.mrb[0].mxu0 %v1078
      %v1362 = vpop.f32.mrb[0].mxu0
      %v1363 = vadd.f32 0.0, %v1362
      %v1364 = vpop.f32.mrb[0].mxu0
      %1365 = vmatprep.mubr.f32.mxu0 0.0
      %1366 = vmatmul.mubr.f32.gmra.mrb[0].mxu0 %v1081
      %v1367 = vpop.f32.mrb[0].mxu0
      %v1368 = vadd.f32 0.0, %v1367
      %v1369 = vpop.f32.mrb[0].mxu0
      %1370 = vmatprep.mubr.f32.mxu0 0.0
      %1371 = vmatmul.mubr.f32.gmra.mrb[0].mxu0 %v1084
      %v1372 = vpop.f32.mrb[0].mxu0
      %v1373 = vadd.f32 0.0, %v1372
      %v1374 = vpop.f32.mrb[0].mxu0
      %1375 = vmatprep.mubr.f32.mxu0 0.0
      %1376 = vmatmul.mubr.f32.gmra.mrb[0].mxu0 %v1087
      %v1377 = vpop.f32.mrb[0].mxu0
      %v1378 = vadd.f32 0.0, %v1377
      %v1379 = vpop.f32.mrb[0].mxu0
      %1380 = vmatprep.mubr.f32.mxu0 0.0
      %1381 = vmatmul.mubr.f32.gmra.mrb[0].mxu0 %v1090
      %v1382 = vpop.f32.mrb[0].mxu0
      %v1383 = vadd.f32 0.0, %v1382
      %v1384 = vpop.f32.mrb[0].mxu0
      %1385 = vmatprep.mubr.f32.mxu0 0.0
      %1386 = vmatmul.mubr.f32.gmra.mrb[0].mxu0 %v1093
      %v1387 = vpop.f32.mrb[0].mxu0
      %v1388 = vadd.f32 0.0, %v1387
      %v1389 = vpop.f32.mrb[0].mxu0
      %1390 = vdwg.mxu0
      %v1391 = vmax.f32 %v1165, %v1313
      %v1392 = vmax.f32 %v1170, %v1318
      %v1393 = vmax.f32 %v1175, %v1323
      %v1394 = vmax.f32 %v1180, %v1328
      %v1395 = vmax.f32 %v1185, %v1333
      %v1396 = vmax.f32 %v1190, %v1338
      %v1397 = vmax.f32 %v1195, %v1343
      %v1398 = vmax.f32 %v1200, %v1348
      %v1399 = vmax.f32 %v1205, %v1353
      %v1400 = vmax.f32 %v1210, %v1358
      %v1401 = vmax.f32 %v1215, %v1363
      %v1402 = vmax.f32 %v1220, %v1368
      %v1403 = vmax.f32 %v1225, %v1373
      %v1404 = vmax.f32 %v1230, %v1378
      %v1405 = vmax.f32 %v1235, %v1383
      %v1406 = vmax.f32 %v1240, %v1388
      %vm1407 = vcmask 211968
      %1408 = vst.msk [vmem:[#allocation2] sm:$0xff] %vm1407, %v1391
      %1409 = vst.msk [vmem:[#allocation2 + $0x8] sm:$0xff] %vm1407, %v1392
      %1410 = vst.msk [vmem:[#allocation2 + $0x10] sm:$0xff] %vm1407, %v1393
      %1411 = vst.msk [vmem:[#allocation2 + $0x18] sm:$0xff] %vm1407, %v1394
      %1412 = vst.msk [vmem:[#allocation2 + $0x20] sm:$0xff] %vm1407, %v1395
      %1413 = vst.msk [vmem:[#allocation2 + $0x28] sm:$0xff] %vm1407, %v1396
      %1414 = vst.msk [vmem:[#allocation2 + $0x30] sm:$0xff] %vm1407, %v1397
      %1415 = vst.msk [vmem:[#allocation2 + $0x38] sm:$0xff] %vm1407, %v1398
      %1416 = vst.msk [vmem:[#allocation2 + $0x40] sm:$0xff] %vm1407, %v1399
      %1417 = vst.msk [vmem:[#allocation2 + $0x48] sm:$0xff] %vm1407, %v1400
      %1418 = vst.msk [vmem:[#allocation2 + $0x50] sm:$0xff] %vm1407, %v1401
      %1419 = vst.msk [vmem:[#allocation2 + $0x58] sm:$0xff] %vm1407, %v1402
      %1420 = vst.msk [vmem:[#allocation2 + $0x60] sm:$0xff] %vm1407, %v1403
      %1421 = vst.msk [vmem:[#allocation2 + $0x68] sm:$0xff] %vm1407, %v1404
      %1422 = vst.msk [vmem:[#allocation2 + $0x70] sm:$0xff] %vm1407, %v1405
      %vm1423 = vcmask 209920
      %1424 = vst.msk [vmem:[#allocation2 + $0x78] sm:$0x3f] %vm1423, %v1406
      %v1425 = vld [vmem:[%s1 + $0xd0] sm:$0xff]
      %v1426 = vld [vmem:[%s1 + $0xd8] sm:$0xff]
      %v1427 = vld [vmem:[%s1 + $0xe0] sm:$0xff]
      %v1428 = vld [vmem:[%s1 + $0xe8] sm:$0xff]
      %v1429 = vld [vmem:[%s1 + $0xf0] sm:$0xff]
      %v1430 = vld [vmem:[%s1 + $0xf8] sm:$0xff]
      %v1431 = vld [vmem:[%s1 + $0x100] sm:$0xff]
      %v1432 = vld [vmem:[%s1 + $0x108] sm:$0xff]
      %v1433 = vld [vmem:[%s1 + $0x110] sm:$0xff]
      %v1434 = vld [vmem:[%s1 + $0x118] sm:$0x3f]
      %v1435 = vld [vmem:[%s1 + $0x120] sm:$0x1]
      %v1436 = vld [vmem:[%s1 + $0x128] sm:$0xff]
      %v1437 = vld [vmem:[%s1 + $0x130] sm:$0xff]
      %v1438 = vld [vmem:[%s1 + $0x138] sm:$0xff]
      %v1439 = vld [vmem:[%s1 + $0x140] sm:$0xff]
      %v1440 = vld [vmem:[%s1 + $0x148] sm:$0xff]
      %v1441 = vld [vmem:[%s1 + $0x150] sm:$0xf]
      %v1442 = vld [vmem:[%s1 + $0x158] sm:$0xff]
      %v1443 = vld [vmem:[%s1 + $0x160] sm:$0xff]
      %v1444 = vld [vmem:[%s1 + $0x168] sm:$0xff]
      %v1445 = vld [vmem:[%s1 + $0x170] sm:$0xff]
      %v1446 = vld [vmem:[%s1 + $0x178] sm:$0xff]
      %v1447 = vld [vmem:[%s1 + $0x180] sm:$0xf]
      %v1448 = vld [vmem:[#allocation2] ss:$2 sm:$0xff]
      %s1449 = scalar_lea.vmem [#allocation2], 16
      %v1450 = vld [vmem:[%s1449] ss:$2 sm:$0xff]
      %s1451 = scalar_lea.vmem [#allocation2], 32
      %v1452 = vld [vmem:[%s1451] ss:$2 sm:$0xff]
      %s1453 = scalar_lea.vmem [#allocation2], 48
      %v1454 = vld [vmem:[%s1453] ss:$2 sm:$0xff]
      %s1455 = scalar_lea.vmem [#allocation2], 64
      %v1456 = vld [vmem:[%s1455] ss:$2 sm:$0xff]
      %s1457 = scalar_lea.vmem [#allocation2], 80
      %v1458 = vld [vmem:[%s1457] ss:$2 sm:$0xff]
      %s1459 = scalar_lea.vmem [#allocation2], 96
      %v1460 = vld [vmem:[%s1459] ss:$2 sm:$0xff]
      %s1461 = scalar_lea.vmem [#allocation2], 112
      %v1462 = vld [vmem:[%s1461] ss:$2 sm:$0x3f]
      %s1463 = scalar_lea.vmem [#allocation2], 1
      %v1464 = vld [vmem:[%s1463] ss:$2 sm:$0xff]
      %s1465 = scalar_lea.vmem [#allocation2], 17
      %v1466 = vld [vmem:[%s1465] ss:$2 sm:$0xff]
      %s1467 = scalar_lea.vmem [#allocation2], 33
      %v1468 = vld [vmem:[%s1467] ss:$2 sm:$0xff]
      %s1469 = scalar_lea.vmem [#allocation2], 49
      %v1470 = vld [vmem:[%s1469] ss:$2 sm:$0xff]
      %s1471 = scalar_lea.vmem [#allocation2], 65
      %v1472 = vld [vmem:[%s1471] ss:$2 sm:$0xff]
      %s1473 = scalar_lea.vmem [#allocation2], 81
      %v1474 = vld [vmem:[%s1473] ss:$2 sm:$0xff]
      %s1475 = scalar_lea.vmem [#allocation2], 97
      %v1476 = vld [vmem:[%s1475] ss:$2 sm:$0xff]
      %s1477 = scalar_lea.vmem [#allocation2], 113
      %v1478 = vld [vmem:[%s1477] ss:$2 sm:$0x3f]
      %s1479 = scalar_lea.vmem [#allocation2], 2
      %v1480 = vld [vmem:[%s1479] ss:$2 sm:$0xff]
      %s1481 = scalar_lea.vmem [#allocation2], 18
      %v1482 = vld [vmem:[%s1481] ss:$2 sm:$0xff]
      %s1483 = scalar_lea.vmem [#allocation2], 34
      %v1484 = vld [vmem:[%s1483] ss:$2 sm:$0xff]
      %s1485 = scalar_lea.vmem [#allocation2], 50
      %v1486 = vld [vmem:[%s1485] ss:$2 sm:$0xff]
      %s1487 = scalar_lea.vmem [#allocation2], 66
      %v1488 = vld [vmem:[%s1487] ss:$2 sm:$0xff]
      %s1489 = scalar_lea.vmem [#allocation2], 82
      %v1490 = vld [vmem:[%s1489] ss:$2 sm:$0xff]
      %s1491 = scalar_lea.vmem [#allocation2], 98
      %v1492 = vld [vmem:[%s1491] ss:$2 sm:$0xff]
      %s1493 = scalar_lea.vmem [#allocation2], 114
      %v1494 = vld [vmem:[%s1493] ss:$2 sm:$0x3f]
      %1503 = vrot.lane.b32.xlu0 %v1464, 26
      %v1504 = vpop.permute.xlu0 %1503
      %1505 = vrot.lane.b32.xlu0 %v1466, 26
      %v1506 = vpop.permute.xlu0 %1505
      %1507 = vrot.lane.b32.xlu0 %v1468, 26
      %v1508 = vpop.permute.xlu0 %1507
      %1509 = vrot.lane.b32.xlu0 %v1470, 26
      %v1510 = vpop.permute.xlu0 %1509
      %1511 = vrot.lane.b32.xlu0 %v1472, 26
      %v1512 = vpop.permute.xlu0 %1511
      %1513 = vrot.lane.b32.xlu0 %v1474, 26
      %v1514 = vpop.permute.xlu0 %1513
      %1515 = vrot.lane.b32.xlu0 %v1476, 26
      %v1516 = vpop.permute.xlu0 %1515
      %1517 = vrot.lane.b32.xlu0 %v1478, 26
      %v1518 = vpop.permute.xlu0 %1517
      %1535 = vrot.lane.b32.xlu0 %v1480, 52
      %v1536 = vpop.permute.xlu0 %1535
      %1537 = vrot.lane.b32.xlu0 %v1482, 52
      %v1538 = vpop.permute.xlu0 %1537
      %1539 = vrot.lane.b32.xlu0 %v1484, 52
      %v1540 = vpop.permute.xlu0 %1539
      %1541 = vrot.lane.b32.xlu0 %v1486, 52
      %v1542 = vpop.permute.xlu0 %1541
      %1543 = vrot.lane.b32.xlu0 %v1488, 52
      %v1544 = vpop.permute.xlu0 %1543
      %1545 = vrot.lane.b32.xlu0 %v1490, 52
      %v1546 = vpop.permute.xlu0 %1545
      %1547 = vrot.lane.b32.xlu0 %v1492, 52
      %v1548 = vpop.permute.xlu0 %1547
      %1549 = vrot.lane.b32.xlu0 %v1494, 52
      %v1550 = vpop.permute.xlu0 %1549
      %v1559 = vsel %vm1407, %v1448, %v1504
      %v1560 = vsel %vm1407, %v1450, %v1506
      %v1561 = vsel %vm1407, %v1452, %v1508
      %v1562 = vsel %vm1407, %v1454, %v1510
      %v1563 = vsel %vm1407, %v1456, %v1512
      %v1564 = vsel %vm1407, %v1458, %v1514
      %v1565 = vsel %vm1407, %v1460, %v1516
      %v1566 = vsel %vm1407, %v1462, %v1518
      %v1567 = vsel %vm1046, %v1559, %v1536
      %v1568 = vsel %vm1046, %v1560, %v1538
      %v1569 = vsel %vm1046, %v1561, %v1540
      %v1570 = vsel %vm1046, %v1562, %v1542
      %v1571 = vsel %vm1046, %v1563, %v1544
      %v1572 = vsel %vm1046, %v1564, %v1546
      %v1573 = vsel %vm1046, %v1565, %v1548
      %v1574 = vsel %vm1046, %v1566, %v1550
      %vm1575 = vcmask 637952
      %v1577 = vsel %vm1575, %v1567, 0
      %v1580 = vsel %vm1575, %v1568, 0
      %v1583 = vsel %vm1575, %v1569, 0
      %v1586 = vsel %vm1575, %v1570, 0
      %v1589 = vsel %vm1575, %v1571, 0
      %v1592 = vsel %vm1575, %v1572, 0
      %v1595 = vsel %vm1575, %v1573, 0
      %v1598 = vsel %vm1575, %v1574, 0
      %vm1600 = vcmask 1045504
      %v1602 = vsel %vm1600, %v1434, 0
      %1604 = vmatprep.subr.mxu0 0.0
      %1605 = vmatpush1.msra.mxu0 %v1425
      %1606 = vmatprep.subr.mxu0 0.0
      %1607 = vmatpush1.msra.mxu0 %v1426
      %1608 = vmatprep.subr.mxu0 0.0
      %1609 = vmatpush1.msra.mxu0 %v1427
      %1610 = vmatprep.subr.mxu0 0.0
      %1611 = vmatpush1.msra.mxu0 %v1428
      %1612 = vmatprep.subr.mxu0 0.0
      %1613 = vmatpush1.msra.mxu0 %v1429
      %1614 = vmatprep.subr.mxu0 0.0
      %1615 = vmatpush1.msra.mxu0 %v1430
      %1616 = vmatprep.subr.mxu0 0.0
      %1617 = vmatpush1.msra.mxu0 %v1431
      %1618 = vmatprep.subr.mxu0 0.0
      %1619 = vmatpush1.msra.mxu0 %v1432
      %1620 = vmatprep.subr.mxu0 0.0
      %1621 = vmatpush1.msra.mxu0 %v1433
      %1622 = vmatprep.subr.mxu0 0.0
      %1623 = vmatpush1.msra.mxu0 %v1602
      %1624 = vmatprep.subr.mxu0 0.0
      %1625 = vmatpush1.msra.mxu0 0.0
      %1626 = vmatprep.subr.mxu0 0.0
      %1627 = vmatpush1.msra.mxu0 0.0
      %1628 = vmatprep.subr.mxu0 0.0
      %1629 = vmatpush1.msra.mxu0 0.0
      %1630 = vmatprep.subr.mxu0 0.0
      %1631 = vmatpush1.msra.mxu0 0.0
      %1632 = vmatprep.subr.mxu0 0.0
      %1633 = vmatpush1.msra.mxu0 0.0
      %1634 = vmatprep.subr.mxu0 0.0
      %1635 = vmatpush1.msra.mxu0 0.0
      %1636 = vmatprep.subr.mxu0 0.0
      %1637 = vmatpush1.msra.mxu0 0.0
      %1638 = vmatprep.subr.mxu0 0.0
      %1639 = vmatpush1.msra.mxu0 0.0
      %1640 = vmatprep.subr.mxu0 0.0
      %1641 = vmatpush1.msra.mxu0 0.0
      %1642 = vmatprep.subr.mxu0 0.0
      %1643 = vmatpush1.msra.mxu0 0.0
      %1644 = vmatprep.subr.mxu0 0.0
      %1645 = vmatpush1.msra.mxu0 0.0
      %1646 = vmatprep.subr.mxu0 0.0
      %1647 = vmatpush1.msra.mxu0 0.0
      %1648 = vmatprep.subr.mxu0 0.0
      %1649 = vmatpush1.msra.mxu0 0.0
      %1650 = vmatprep.subr.mxu0 0.0
      %1651 = vmatpush1.msra.mxu0 0.0
      %1652 = vmatprep.subr.mxu0 0.0
      %1653 = vmatpush1.msra.mxu0 0.0
      %1654 = vmatprep.subr.mxu0 0.0
      %1655 = vmatpush1.msra.mxu0 0.0
      %1656 = vmatprep.subr.mxu0 0.0
      %1657 = vmatpush1.msra.mxu0 0.0
      %1658 = vmatprep.subr.mxu0 0.0
      %1659 = vmatpush1.msra.mxu0 0.0
      %1660 = vmatprep.subr.mxu0 0.0
      %1661 = vmatpush1.msra.mxu0 0.0
      %1662 = vmatprep.subr.mxu0 0.0
      %1663 = vmatpush1.msra.mxu0 0.0
      %1664 = vmatprep.subr.mxu0 0.0
      %1665 = vmatpush1.msra.mxu0 0.0
      %1666 = vmatprep.subr.mxu0 0.0
      %1667 = vmatpush1.msra.mxu0 0.0
      %1668 = vmatprep.mubr.f32.mxu0 0.0
      %1669 = vmatmul.mubr.f32.gmra.mrb[0].mxu0 %v1577
      %v1670 = vpop.f32.mrb[0].mxu0
      %v1671 = vadd.f32 0.0, %v1670
      %v1672 = vpop.f32.mrb[0].mxu0
      %1673 = vmatprep.mubr.f32.mxu0 0.0
      %1674 = vmatmul.mubr.f32.gmra.mrb[0].mxu0 %v1580
      %v1675 = vpop.f32.mrb[0].mxu0
      %v1676 = vadd.f32 0.0, %v1675
      %v1677 = vpop.f32.mrb[0].mxu0
      %1678 = vmatprep.mubr.f32.mxu0 0.0
      %1679 = vmatmul.mubr.f32.gmra.mrb[0].mxu0 %v1583
      %v1680 = vpop.f32.mrb[0].mxu0
      %v1681 = vadd.f32 0.0, %v1680
      %v1682 = vpop.f32.mrb[0].mxu0
      %1683 = vmatprep.mubr.f32.mxu0 0.0
      %1684 = vmatmul.mubr.f32.gmra.mrb[0].mxu0 %v1586
      %v1685 = vpop.f32.mrb[0].mxu0
      %v1686 = vadd.f32 0.0, %v1685
      %v1687 = vpop.f32.mrb[0].mxu0
      %1688 = vmatprep.mubr.f32.mxu0 0.0
      %1689 = vmatmul.mubr.f32.gmra.mrb[0].mxu0 %v1589
      %v1690 = vpop.f32.mrb[0].mxu0
      %v1691 = vadd.f32 0.0, %v1690
      %v1692 = vpop.f32.mrb[0].mxu0
      %1693 = vmatprep.mubr.f32.mxu0 0.0
      %1694 = vmatmul.mubr.f32.gmra.mrb[0].mxu0 %v1592
      %v1695 = vpop.f32.mrb[0].mxu0
      %v1696 = vadd.f32 0.0, %v1695
      %v1697 = vpop.f32.mrb[0].mxu0
      %1698 = vmatprep.mubr.f32.mxu0 0.0
      %1699 = vmatmul.mubr.f32.gmra.mrb[0].mxu0 %v1595
      %v1700 = vpop.f32.mrb[0].mxu0
      %v1701 = vadd.f32 0.0, %v1700
      %v1702 = vpop.f32.mrb[0].mxu0
      %1703 = vmatprep.mubr.f32.mxu0 0.0
      %1704 = vmatmul.mubr.f32.gmra.mrb[0].mxu0 %v1598
      %v1705 = vpop.f32.mrb[0].mxu0
      %v1706 = vadd.f32 0.0, %v1705
      %v1707 = vpop.f32.mrb[0].mxu0
      %1708 = vdwg.mxu0
      %s1709 = scalar_lea.vmem [#allocation2], 3
      %v1710 = vld [vmem:[%s1709] ss:$2 sm:$0xff]
      %s1711 = scalar_lea.vmem [#allocation2], 19
      %v1712 = vld [vmem:[%s1711] ss:$2 sm:$0xff]
      %s1713 = scalar_lea.vmem [#allocation2], 35
      %v1714 = vld [vmem:[%s1713] ss:$2 sm:$0xff]
      %s1715 = scalar_lea.vmem [#allocation2], 51
      %v1716 = vld [vmem:[%s1715] ss:$2 sm:$0xff]
      %s1717 = scalar_lea.vmem [#allocation2], 67
      %v1718 = vld [vmem:[%s1717] ss:$2 sm:$0xff]
      %s1719 = scalar_lea.vmem [#allocation2], 83
      %v1720 = vld [vmem:[%s1719] ss:$2 sm:$0xff]
      %s1721 = scalar_lea.vmem [#allocation2], 99
      %v1722 = vld [vmem:[%s1721] ss:$2 sm:$0xff]
      %s1723 = scalar_lea.vmem [#allocation2], 115
      %v1724 = vld [vmem:[%s1723] ss:$2 sm:$0x3f]
      %1725 = vrot.lane.b32.xlu0 %v1480, 26
      %v1726 = vpop.permute.xlu0 %1725
      %1727 = vrot.lane.b32.xlu0 %v1482, 26
      %v1728 = vpop.permute.xlu0 %1727
      %1729 = vrot.lane.b32.xlu0 %v1484, 26
      %v1730 = vpop.permute.xlu0 %1729
      %1731 = vrot.lane.b32.xlu0 %v1486, 26
      %v1732 = vpop.permute.xlu0 %1731
      %1733 = vrot.lane.b32.xlu0 %v1488, 26
      %v1734 = vpop.permute.xlu0 %1733
      %1735 = vrot.lane.b32.xlu0 %v1490, 26
      %v1736 = vpop.permute.xlu0 %1735
      %1737 = vrot.lane.b32.xlu0 %v1492, 26
      %v1738 = vpop.permute.xlu0 %1737
      %1739 = vrot.lane.b32.xlu0 %v1494, 26
      %v1740 = vpop.permute.xlu0 %1739
      %1757 = vrot.lane.b32.xlu0 %v1710, 52
      %v1758 = vpop.permute.xlu0 %1757
      %1759 = vrot.lane.b32.xlu0 %v1712, 52
      %v1760 = vpop.permute.xlu0 %1759
      %1761 = vrot.lane.b32.xlu0 %v1714, 52
      %v1762 = vpop.permute.xlu0 %1761
      %1763 = vrot.lane.b32.xlu0 %v1716, 52
      %v1764 = vpop.permute.xlu0 %1763
      %1765 = vrot.lane.b32.xlu0 %v1718, 52
      %v1766 = vpop.permute.xlu0 %1765
      %1767 = vrot.lane.b32.xlu0 %v1720, 52
      %v1768 = vpop.permute.xlu0 %1767
      %1769 = vrot.lane.b32.xlu0 %v1722, 52
      %v1770 = vpop.permute.xlu0 %1769
      %1771 = vrot.lane.b32.xlu0 %v1724, 52
      %v1772 = vpop.permute.xlu0 %1771
      %v1781 = vsel %vm1407, %v1464, %v1726
      %v1782 = vsel %vm1407, %v1466, %v1728
      %v1783 = vsel %vm1407, %v1468, %v1730
      %v1784 = vsel %vm1407, %v1470, %v1732
      %v1785 = vsel %vm1407, %v1472, %v1734
      %v1786 = vsel %vm1407, %v1474, %v1736
      %v1787 = vsel %vm1407, %v1476, %v1738
      %v1788 = vsel %vm1407, %v1478, %v1740
      %v1789 = vsel %vm1046, %v1781, %v1758
      %v1790 = vsel %vm1046, %v1782, %v1760
      %v1791 = vsel %vm1046, %v1783, %v1762
      %v1792 = vsel %vm1046, %v1784, %v1764
      %v1793 = vsel %vm1046, %v1785, %v1766
      %v1794 = vsel %vm1046, %v1786, %v1768
      %v1795 = vsel %vm1046, %v1787, %v1770
      %v1796 = vsel %vm1046, %v1788, %v1772
      %v1798 = vsel %vm1575, %v1789, 0
      %v1801 = vsel %vm1575, %v1790, 0
      %v1804 = vsel %vm1575, %v1791, 0
      %v1807 = vsel %vm1575, %v1792, 0
      %v1810 = vsel %vm1575, %v1793, 0
      %v1813 = vsel %vm1575, %v1794, 0
      %v1816 = vsel %vm1575, %v1795, 0
      %v1819 = vsel %vm1575, %v1796, 0
      %1821 = vmatprep.subr.mxu0 0.0
      %1822 = vmatpush1.msra.mxu0 %v1425
      %1823 = vmatprep.subr.mxu0 0.0
      %1824 = vmatpush1.msra.mxu0 %v1426
      %1825 = vmatprep.subr.mxu0 0.0
      %1826 = vmatpush1.msra.mxu0 %v1427
      %1827 = vmatprep.subr.mxu0 0.0
      %1828 = vmatpush1.msra.mxu0 %v1428
      %1829 = vmatprep.subr.mxu0 0.0
      %1830 = vmatpush1.msra.mxu0 %v1429
      %1831 = vmatprep.subr.mxu0 0.0
      %1832 = vmatpush1.msra.mxu0 %v1430
      %1833 = vmatprep.subr.mxu0 0.0
      %1834 = vmatpush1.msra.mxu0 %v1431
      %1835 = vmatprep.subr.mxu0 0.0
      %1836 = vmatpush1.msra.mxu0 %v1432
      %1837 = vmatprep.subr.mxu0 0.0
      %1838 = vmatpush1.msra.mxu0 %v1433
      %1839 = vmatprep.subr.mxu0 0.0
      %1840 = vmatpush1.msra.mxu0 %v1602
      %1841 = vmatprep.subr.mxu0 0.0
      %1842 = vmatpush1.msra.mxu0 0.0
      %1843 = vmatprep.subr.mxu0 0.0
      %1844 = vmatpush1.msra.mxu0 0.0
      %1845 = vmatprep.subr.mxu0 0.0
      %1846 = vmatpush1.msra.mxu0 0.0
      %1847 = vmatprep.subr.mxu0 0.0
      %1848 = vmatpush1.msra.mxu0 0.0
      %1849 = vmatprep.subr.mxu0 0.0
      %1850 = vmatpush1.msra.mxu0 0.0
      %1851 = vmatprep.subr.mxu0 0.0
      %1852 = vmatpush1.msra.mxu0 0.0
      %1853 = vmatprep.subr.mxu0 0.0
      %1854 = vmatpush1.msra.mxu0 0.0
      %1855 = vmatprep.subr.mxu0 0.0
      %1856 = vmatpush1.msra.mxu0 0.0
      %1857 = vmatprep.subr.mxu0 0.0
      %1858 = vmatpush1.msra.mxu0 0.0
      %1859 = vmatprep.subr.mxu0 0.0
      %1860 = vmatpush1.msra.mxu0 0.0
      %1861 = vmatprep.subr.mxu0 0.0
      %1862 = vmatpush1.msra.mxu0 0.0
      %1863 = vmatprep.subr.mxu0 0.0
      %1864 = vmatpush1.msra.mxu0 0.0
      %1865 = vmatprep.subr.mxu0 0.0
      %1866 = vmatpush1.msra.mxu0 0.0
      %1867 = vmatprep.subr.mxu0 0.0
      %1868 = vmatpush1.msra.mxu0 0.0
      %1869 = vmatprep.subr.mxu0 0.0
      %1870 = vmatpush1.msra.mxu0 0.0
      %1871 = vmatprep.subr.mxu0 0.0
      %1872 = vmatpush1.msra.mxu0 0.0
      %1873 = vmatprep.subr.mxu0 0.0
      %1874 = vmatpush1.msra.mxu0 0.0
      %1875 = vmatprep.subr.mxu0 0.0
      %1876 = vmatpush1.msra.mxu0 0.0
      %1877 = vmatprep.subr.mxu0 0.0
      %1878 = vmatpush1.msra.mxu0 0.0
      %1879 = vmatprep.subr.mxu0 0.0
      %1880 = vmatpush1.msra.mxu0 0.0
      %1881 = vmatprep.subr.mxu0 0.0
      %1882 = vmatpush1.msra.mxu0 0.0
      %1883 = vmatprep.subr.mxu0 0.0
      %1884 = vmatpush1.msra.mxu0 0.0
      %1885 = vmatprep.mubr.f32.mxu0 0.0
      %1886 = vmatmul.mubr.f32.gmra.mrb[0].mxu0 %v1798
      %v1887 = vpop.f32.mrb[0].mxu0
      %v1888 = vadd.f32 0.0, %v1887
      %v1889 = vpop.f32.mrb[0].mxu0
      %1890 = vmatprep.mubr.f32.mxu0 0.0
      %1891 = vmatmul.mubr.f32.gmra.mrb[0].mxu0 %v1801
      %v1892 = vpop.f32.mrb[0].mxu0
      %v1893 = vadd.f32 0.0, %v1892
      %v1894 = vpop.f32.mrb[0].mxu0
      %1895 = vmatprep.mubr.f32.mxu0 0.0
      %1896 = vmatmul.mubr.f32.gmra.mrb[0].mxu0 %v1804
      %v1897 = vpop.f32.mrb[0].mxu0
      %v1898 = vadd.f32 0.0, %v1897
      %v1899 = vpop.f32.mrb[0].mxu0
      %1900 = vmatprep.mubr.f32.mxu0 0.0
      %1901 = vmatmul.mubr.f32.gmra.mrb[0].mxu0 %v1807
      %v1902 = vpop.f32.mrb[0].mxu0
      %v1903 = vadd.f32 0.0, %v1902
      %v1904 = vpop.f32.mrb[0].mxu0
      %1905 = vmatprep.mubr.f32.mxu0 0.0
      %1906 = vmatmul.mubr.f32.gmra.mrb[0].mxu0 %v1810
      %v1907 = vpop.f32.mrb[0].mxu0
      %v1908 = vadd.f32 0.0, %v1907
      %v1909 = vpop.f32.mrb[0].mxu0
      %1910 = vmatprep.mubr.f32.mxu0 0.0
      %1911 = vmatmul.mubr.f32.gmra.mrb[0].mxu0 %v1813
      %v1912 = vpop.f32.mrb[0].mxu0
      %v1913 = vadd.f32 0.0, %v1912
      %v1914 = vpop.f32.mrb[0].mxu0
      %1915 = vmatprep.mubr.f32.mxu0 0.0
      %1916 = vmatmul.mubr.f32.gmra.mrb[0].mxu0 %v1816
      %v1917 = vpop.f32.mrb[0].mxu0
      %v1918 = vadd.f32 0.0, %v1917
      %v1919 = vpop.f32.mrb[0].mxu0
      %1920 = vmatprep.mubr.f32.mxu0 0.0
      %1921 = vmatmul.mubr.f32.gmra.mrb[0].mxu0 %v1819
      %v1922 = vpop.f32.mrb[0].mxu0
      %v1923 = vadd.f32 0.0, %v1922
      %v1924 = vpop.f32.mrb[0].mxu0
      %1925 = vdwg.mxu0
      %v1926 = vmax.f32 %v1671, %v1888
      %v1927 = vmax.f32 %v1676, %v1893
      %v1928 = vmax.f32 %v1681, %v1898
      %v1929 = vmax.f32 %v1686, %v1903
      %v1930 = vmax.f32 %v1691, %v1908
      %v1931 = vmax.f32 %v1696, %v1913
      %v1932 = vmax.f32 %v1701, %v1918
      %v1933 = vmax.f32 %v1706, %v1923
      %v1934 = vlaneseq
      %v1935 = vshrl.u32 %v1934, 7
      %v1936 = vsub.s32 0, %v1935
      %v1937 = vrot.slane %v1435, %v1936
      %v1938 = vadd.f32 %v1926, %v1937
      %v1939 = vadd.f32 %v1927, %v1937
      %v1940 = vadd.f32 %v1928, %v1937
      %v1941 = vadd.f32 %v1929, %v1937
      %v1942 = vadd.f32 %v1930, %v1937
      %v1943 = vadd.f32 %v1931, %v1937
      %v1944 = vadd.f32 %v1932, %v1937
      %v1945 = vadd.f32 %v1933, %v1937
      %v1946 = vmax.f32 %v1938, 0.0
      %v1947 = vmax.f32 %v1939, 0.0
      %v1948 = vmax.f32 %v1940, 0.0
      %v1949 = vmax.f32 %v1941, 0.0
      %v1950 = vmax.f32 %v1942, 0.0
      %v1951 = vmax.f32 %v1943, 0.0
      %v1952 = vmax.f32 %v1944, 0.0
      %v1953 = vmax.f32 %v1945, 0.0
      %vm1954 = vcmask 359424
      %v1956 = vsel %vm1954, %v1946, 0
      %v1959 = vsel %vm1954, %v1947, 0
      %v1962 = vsel %vm1954, %v1948, 0
      %v1965 = vsel %vm1954, %v1949, 0
      %v1968 = vsel %vm1954, %v1950, 0
      %v1971 = vsel %vm1954, %v1951, 0
      %v1974 = vsel %vm1954, %v1952, 0
      %v1977 = vsel %vm1954, %v1953, 0
      %v1980 = vsel %vm476, %v1441, 0
      %1982 = vmatprep.subr.mxu0 0.0
      %1983 = vmatpush1.msra.mxu0 %v1436
      %1984 = vmatprep.subr.mxu0 0.0
      %1985 = vmatpush1.msra.mxu0 %v1437
      %1986 = vmatprep.subr.mxu0 0.0
      %1987 = vmatpush1.msra.mxu0 %v1438
      %1988 = vmatprep.subr.mxu0 0.0
      %1989 = vmatpush1.msra.mxu0 %v1439
      %1990 = vmatprep.subr.mxu0 0.0
      %1991 = vmatpush1.msra.mxu0 %v1440
      %1992 = vmatprep.subr.mxu0 0.0
      %1993 = vmatpush1.msra.mxu0 %v1980
      %1994 = vmatprep.subr.mxu0 0.0
      %1995 = vmatpush1.msra.mxu0 0.0
      %1996 = vmatprep.subr.mxu0 0.0
      %1997 = vmatpush1.msra.mxu0 0.0
      %1998 = vmatprep.subr.mxu0 0.0
      %1999 = vmatpush1.msra.mxu0 0.0
      %2000 = vmatprep.subr.mxu0 0.0
      %2001 = vmatpush1.msra.mxu0 0.0
      %2002 = vmatprep.subr.mxu0 0.0
      %2003 = vmatpush1.msra.mxu0 0.0
      %2004 = vmatprep.subr.mxu0 0.0
      %2005 = vmatpush1.msra.mxu0 0.0
      %2006 = vmatprep.subr.mxu0 0.0
      %2007 = vmatpush1.msra.mxu0 0.0
      %2008 = vmatprep.subr.mxu0 0.0
      %2009 = vmatpush1.msra.mxu0 0.0
      %2010 = vmatprep.subr.mxu0 0.0
      %2011 = vmatpush1.msra.mxu0 0.0
      %2012 = vmatprep.subr.mxu0 0.0
      %2013 = vmatpush1.msra.mxu0 0.0
      %2014 = vmatprep.subr.mxu0 0.0
      %2015 = vmatpush1.msra.mxu0 0.0
      %2016 = vmatprep.subr.mxu0 0.0
      %2017 = vmatpush1.msra.mxu0 0.0
      %2018 = vmatprep.subr.mxu0 0.0
      %2019 = vmatpush1.msra.mxu0 0.0
      %2020 = vmatprep.subr.mxu0 0.0
      %2021 = vmatpush1.msra.mxu0 0.0
      %2022 = vmatprep.subr.mxu0 0.0
      %2023 = vmatpush1.msra.mxu0 0.0
      %2024 = vmatprep.subr.mxu0 0.0
      %2025 = vmatpush1.msra.mxu0 0.0
      %2026 = vmatprep.subr.mxu0 0.0
      %2027 = vmatpush1.msra.mxu0 0.0
      %2028 = vmatprep.subr.mxu0 0.0
      %2029 = vmatpush1.msra.mxu0 0.0
      %2030 = vmatprep.subr.mxu0 0.0
      %2031 = vmatpush1.msra.mxu0 0.0
      %2032 = vmatprep.subr.mxu0 0.0
      %2033 = vmatpush1.msra.mxu0 0.0
      %2034 = vmatprep.subr.mxu0 0.0
      %2035 = vmatpush1.msra.mxu0 0.0
      %2036 = vmatprep.subr.mxu0 0.0
      %2037 = vmatpush1.msra.mxu0 0.0
      %2038 = vmatprep.subr.mxu0 0.0
      %2039 = vmatpush1.msra.mxu0 0.0
      %2040 = vmatprep.subr.mxu0 0.0
      %2041 = vmatpush1.msra.mxu0 0.0
      %2042 = vmatprep.subr.mxu0 0.0
      %2043 = vmatpush1.msra.mxu0 0.0
      %2044 = vmatprep.subr.mxu0 0.0
      %2045 = vmatpush1.msra.mxu0 0.0
      %2046 = vmatprep.mubr.f32.mxu0 0.0
      %2047 = vmatmul.mubr.f32.gmra.mrb[0].mxu0 %v1956
      %v2048 = vpop.f32.mrb[0].mxu0
      %v2049 = vadd.f32 0.0, %v2048
      %v2050 = vpop.f32.mrb[0].mxu0
      %2051 = vmatprep.mubr.f32.mxu0 0.0
      %2052 = vmatmul.mubr.f32.gmra.mrb[0].mxu0 %v1959
      %v2053 = vpop.f32.mrb[0].mxu0
      %v2054 = vadd.f32 0.0, %v2053
      %v2055 = vpop.f32.mrb[0].mxu0
      %2056 = vmatprep.mubr.f32.mxu0 0.0
      %2057 = vmatmul.mubr.f32.gmra.mrb[0].mxu0 %v1962
      %v2058 = vpop.f32.mrb[0].mxu0
      %v2059 = vadd.f32 0.0, %v2058
      %v2060 = vpop.f32.mrb[0].mxu0
      %2061 = vmatprep.mubr.f32.mxu0 0.0
      %2062 = vmatmul.mubr.f32.gmra.mrb[0].mxu0 %v1965
      %v2063 = vpop.f32.mrb[0].mxu0
      %v2064 = vadd.f32 0.0, %v2063
      %v2065 = vpop.f32.mrb[0].mxu0
      %2066 = vmatprep.mubr.f32.mxu0 0.0
      %2067 = vmatmul.mubr.f32.gmra.mrb[0].mxu0 %v1968
      %v2068 = vpop.f32.mrb[0].mxu0
      %v2069 = vadd.f32 0.0, %v2068
      %v2070 = vpop.f32.mrb[0].mxu0
      %2071 = vmatprep.mubr.f32.mxu0 0.0
      %2072 = vmatmul.mubr.f32.gmra.mrb[0].mxu0 %v1971
      %v2073 = vpop.f32.mrb[0].mxu0
      %v2074 = vadd.f32 0.0, %v2073
      %v2075 = vpop.f32.mrb[0].mxu0
      %2076 = vmatprep.mubr.f32.mxu0 0.0
      %2077 = vmatmul.mubr.f32.gmra.mrb[0].mxu0 %v1974
      %v2078 = vpop.f32.mrb[0].mxu0
      %v2079 = vadd.f32 0.0, %v2078
      %v2080 = vpop.f32.mrb[0].mxu0
      %2081 = vmatprep.mubr.f32.mxu0 0.0
      %2082 = vmatmul.mubr.f32.gmra.mrb[0].mxu0 %v1977
      %v2083 = vpop.f32.mrb[0].mxu0
      %v2084 = vadd.f32 0.0, %v2083
      %v2085 = vpop.f32.mrb[0].mxu0
      %2086 = vdwg.mxu0
      %v2088 = vsel %vm476, %v1447, 0
      %2090 = vmatprep.subr.mxu0 0.0
      %2091 = vmatpush1.msra.mxu0 %v1442
      %2092 = vmatprep.subr.mxu0 0.0
      %2093 = vmatpush1.msra.mxu0 %v1443
      %2094 = vmatprep.subr.mxu0 0.0
      %2095 = vmatpush1.msra.mxu0 %v1444
      %2096 = vmatprep.subr.mxu0 0.0
      %2097 = vmatpush1.msra.mxu0 %v1445
      %2098 = vmatprep.subr.mxu0 0.0
      %2099 = vmatpush1.msra.mxu0 %v1446
      %2100 = vmatprep.subr.mxu0 0.0
      %2101 = vmatpush1.msra.mxu0 %v2088
      %2102 = vmatprep.subr.mxu0 0.0
      %2103 = vmatpush1.msra.mxu0 0.0
      %2104 = vmatprep.subr.mxu0 0.0
      %2105 = vmatpush1.msra.mxu0 0.0
      %2106 = vmatprep.subr.mxu0 0.0
      %2107 = vmatpush1.msra.mxu0 0.0
      %2108 = vmatprep.subr.mxu0 0.0
      %2109 = vmatpush1.msra.mxu0 0.0
      %2110 = vmatprep.subr.mxu0 0.0
      %2111 = vmatpush1.msra.mxu0 0.0
      %2112 = vmatprep.subr.mxu0 0.0
      %2113 = vmatpush1.msra.mxu0 0.0
      %2114 = vmatprep.subr.mxu0 0.0
      %2115 = vmatpush1.msra.mxu0 0.0
      %2116 = vmatprep.subr.mxu0 0.0
      %2117 = vmatpush1.msra.mxu0 0.0
      %2118 = vmatprep.subr.mxu0 0.0
      %2119 = vmatpush1.msra.mxu0 0.0
      %2120 = vmatprep.subr.mxu0 0.0
      %2121 = vmatpush1.msra.mxu0 0.0
      %2122 = vmatprep.subr.mxu0 0.0
      %2123 = vmatpush1.msra.mxu0 0.0
      %2124 = vmatprep.subr.mxu0 0.0
      %2125 = vmatpush1.msra.mxu0 0.0
      %2126 = vmatprep.subr.mxu0 0.0
      %2127 = vmatpush1.msra.mxu0 0.0
      %2128 = vmatprep.subr.mxu0 0.0
      %2129 = vmatpush1.msra.mxu0 0.0
      %2130 = vmatprep.subr.mxu0 0.0
      %2131 = vmatpush1.msra.mxu0 0.0
      %2132 = vmatprep.subr.mxu0 0.0
      %2133 = vmatpush1.msra.mxu0 0.0
      %2134 = vmatprep.subr.mxu0 0.0
      %2135 = vmatpush1.msra.mxu0 0.0
      %2136 = vmatprep.subr.mxu0 0.0
      %2137 = vmatpush1.msra.mxu0 0.0
      %2138 = vmatprep.subr.mxu0 0.0
      %2139 = vmatpush1.msra.mxu0 0.0
      %2140 = vmatprep.subr.mxu0 0.0
      %2141 = vmatpush1.msra.mxu0 0.0
      %2142 = vmatprep.subr.mxu0 0.0
      %2143 = vmatpush1.msra.mxu0 0.0
      %2144 = vmatprep.subr.mxu0 0.0
      %2145 = vmatpush1.msra.mxu0 0.0
      %2146 = vmatprep.subr.mxu0 0.0
      %2147 = vmatpush1.msra.mxu0 0.0
      %2148 = vmatprep.subr.mxu0 0.0
      %2149 = vmatpush1.msra.mxu0 0.0
      %2150 = vmatprep.subr.mxu0 0.0
      %2151 = vmatpush1.msra.mxu0 0.0
      %2152 = vmatprep.subr.mxu0 0.0
      %2153 = vmatpush1.msra.mxu0 0.0
      %2154 = vmatprep.mubr.f32.mxu0 0.0
      %2155 = vmatmul.mubr.f32.gmra.mrb[0].mxu0 %v1956
      %v2156 = vpop.f32.mrb[0].mxu0
      %v2157 = vadd.f32 0.0, %v2156
      %v2158 = vpop.f32.mrb[0].mxu0
      %2159 = vmatprep.mubr.f32.mxu0 0.0
      %2160 = vmatmul.mubr.f32.gmra.mrb[0].mxu0 %v1959
      %v2161 = vpop.f32.mrb[0].mxu0
      %v2162 = vadd.f32 0.0, %v2161
      %v2163 = vpop.f32.mrb[0].mxu0
      %2164 = vmatprep.mubr.f32.mxu0 0.0
      %2165 = vmatmul.mubr.f32.gmra.mrb[0].mxu0 %v1962
      %v2166 = vpop.f32.mrb[0].mxu0
      %v2167 = vadd.f32 0.0, %v2166
      %v2168 = vpop.f32.mrb[0].mxu0
      %2169 = vmatprep.mubr.f32.mxu0 0.0
      %2170 = vmatmul.mubr.f32.gmra.mrb[0].mxu0 %v1965
      %v2171 = vpop.f32.mrb[0].mxu0
      %v2172 = vadd.f32 0.0, %v2171
      %v2173 = vpop.f32.mrb[0].mxu0
      %2174 = vmatprep.mubr.f32.mxu0 0.0
      %2175 = vmatmul.mubr.f32.gmra.mrb[0].mxu0 %v1968
      %v2176 = vpop.f32.mrb[0].mxu0
      %v2177 = vadd.f32 0.0, %v2176
      %v2178 = vpop.f32.mrb[0].mxu0
      %2179 = vmatprep.mubr.f32.mxu0 0.0
      %2180 = vmatmul.mubr.f32.gmra.mrb[0].mxu0 %v1971
      %v2181 = vpop.f32.mrb[0].mxu0
      %v2182 = vadd.f32 0.0, %v2181
      %v2183 = vpop.f32.mrb[0].mxu0
      %2184 = vmatprep.mubr.f32.mxu0 0.0
      %2185 = vmatmul.mubr.f32.gmra.mrb[0].mxu0 %v1974
      %v2186 = vpop.f32.mrb[0].mxu0
      %v2187 = vadd.f32 0.0, %v2186
      %v2188 = vpop.f32.mrb[0].mxu0
      %2189 = vmatprep.mubr.f32.mxu0 0.0
      %2190 = vmatmul.mubr.f32.gmra.mrb[0].mxu0 %v1977
      %v2191 = vpop.f32.mrb[0].mxu0
      %v2192 = vadd.f32 0.0, %v2191
      %v2193 = vpop.f32.mrb[0].mxu0
      %2194 = vdwg.mxu0
      %v2195 = vmax.f32 %v2049, %v2157
      %v2196 = vmax.f32 %v2054, %v2162
      %v2197 = vmax.f32 %v2059, %v2167
      %v2198 = vmax.f32 %v2064, %v2172
      %v2199 = vmax.f32 %v2069, %v2177
      %v2200 = vmax.f32 %v2074, %v2182
      %v2201 = vmax.f32 %v2079, %v2187
      %v2202 = vmax.f32 %v2084, %v2192
      %vm2203 = vcmask 162816
      %2204 = vst.msk [vmem:[#allocation3] sm:$0xff] %vm2203, %v2195
      %2205 = vst.msk [vmem:[#allocation3 + $0x8] sm:$0xff] %vm2203, %v2196
      %2206 = vst.msk [vmem:[#allocation3 + $0x10] sm:$0xff] %vm2203, %v2197
      %2207 = vst.msk [vmem:[#allocation3 + $0x18] sm:$0xff] %vm2203, %v2198
      %2208 = vst.msk [vmem:[#allocation3 + $0x20] sm:$0xff] %vm2203, %v2199
      %2209 = vst.msk [vmem:[#allocation3 + $0x28] sm:$0xff] %vm2203, %v2200
      %2210 = vst.msk [vmem:[#allocation3 + $0x30] sm:$0xff] %vm2203, %v2201
      %vm2211 = vcmask 160768
      %2212 = vst.msk [vmem:[#allocation3 + $0x38] sm:$0x3f] %vm2211, %v2202
      %v2213 = vld [vmem:[%s1 + $0x188] sm:$0xff]
      %v2214 = vld [vmem:[%s1 + $0x190] sm:$0xff]
      %v2215 = vld [vmem:[%s1 + $0x198] sm:$0xff]
      %v2216 = vld [vmem:[%s1 + $0x1a0] sm:$0xff]
      %v2217 = vld [vmem:[%s1 + $0x1a8] sm:$0xff]
      %v2218 = vld [vmem:[%s1 + $0x1b0] sm:$0xff]
      %v2219 = vld [vmem:[%s1 + $0x1b8] sm:$0xff]
      %v2220 = vld [vmem:[%s1 + $0x1c0] sm:$0xf]
      %v2221 = vld [vmem:[%s1 + $0x1c8] sm:$0x1]
      %v2222 = vld [vmem:[%s1 + $0x1d0] sm:$0xff]
      %v2223 = vld [vmem:[%s1 + $0x1d8] sm:$0xff]
      %v2224 = vld [vmem:[%s1 + $0x1e0] sm:$0xff]
      %v2225 = vld [vmem:[%s1 + $0x1e8] sm:$0xff]
      %v2226 = vld [vmem:[%s1 + $0x1f0] sm:$0xff]
      %v2227 = vld [vmem:[%s1 + $0x1f8] sm:$0xff]
      %v2228 = vld [vmem:[#allocation3] ss:$8 sm:$0xf]
      %v2229 = vld [vmem:[#allocation3] ss:$8 sm:$0xf0]
      %v2230 = vor.u32 %v2228, %v2229
      %s2231 = scalar_lea.vmem [#allocation3], 1
      %v2232 = vld [vmem:[%s2231] ss:$8 sm:$0xf]
      %v2233 = vld [vmem:[%s2231] ss:$8 sm:$0xf0]
      %v2234 = vor.u32 %v2232, %v2233
      %s2235 = scalar_lea.vmem [#allocation3], 2
      %v2236 = vld [vmem:[%s2235] ss:$8 sm:$0xf]
      %v2237 = vld [vmem:[%s2235] ss:$8 sm:$0xf0]
      %v2238 = vor.u32 %v2236, %v2237
      %2240 = vrot.lane.b32.xlu0 %v2234, 20
      %v2241 = vpop.permute.xlu0 %2240
      %2244 = vrot.lane.b32.xlu0 %v2238, 40
      %v2245 = vpop.permute.xlu0 %2244
      %v2247 = vsel %vm2203, %v2230, %v2241
      %vm2248 = vcmask 326656
      %v2249 = vsel %vm2248, %v2247, %v2245
      %vm2250 = vcmask 490496
      %v2252 = vsel %vm2250, %v2249, 0
      %v2255 = vsel %vm476, %v2220, 0
      %2257 = vmatprep.subr.mxu0 0.0
      %2258 = vmatpush1.msra.mxu0 %v2213
      %2259 = vmatprep.subr.mxu0 0.0
      %2260 = vmatpush1.msra.mxu0 %v2214
      %2261 = vmatprep.subr.mxu0 0.0
      %2262 = vmatpush1.msra.mxu0 %v2215
      %2263 = vmatprep.subr.mxu0 0.0
      %2264 = vmatpush1.msra.mxu0 %v2216
      %2265 = vmatprep.subr.mxu0 0.0
      %2266 = vmatpush1.msra.mxu0 %v2217
      %2267 = vmatprep.subr.mxu0 0.0
      %2268 = vmatpush1.msra.mxu0 %v2218
      %2269 = vmatprep.subr.mxu0 0.0
      %2270 = vmatpush1.msra.mxu0 %v2219
      %2271 = vmatprep.subr.mxu0 0.0
      %2272 = vmatpush1.msra.mxu0 %v2255
      %2273 = vmatprep.subr.mxu0 0.0
      %2274 = vmatpush1.msra.mxu0 0.0
      %2275 = vmatprep.subr.mxu0 0.0
      %2276 = vmatpush1.msra.mxu0 0.0
      %2277 = vmatprep.subr.mxu0 0.0
      %2278 = vmatpush1.msra.mxu0 0.0
      %2279 = vmatprep.subr.mxu0 0.0
      %2280 = vmatpush1.msra.mxu0 0.0
      %2281 = vmatprep.subr.mxu0 0.0
      %2282 = vmatpush1.msra.mxu0 0.0
      %2283 = vmatprep.subr.mxu0 0.0
      %2284 = vmatpush1.msra.mxu0 0.0
      %2285 = vmatprep.subr.mxu0 0.0
      %2286 = vmatpush1.msra.mxu0 0.0
      %2287 = vmatprep.subr.mxu0 0.0
      %2288 = vmatpush1.msra.mxu0 0.0
      %2289 = vmatprep.subr.mxu0 0.0
      %2290 = vmatpush1.msra.mxu0 0.0
      %2291 = vmatprep.subr.mxu0 0.0
      %2292 = vmatpush1.msra.mxu0 0.0
      %2293 = vmatprep.subr.mxu0 0.0
      %2294 = vmatpush1.msra.mxu0 0.0
      %2295 = vmatprep.subr.mxu0 0.0
      %2296 = vmatpush1.msra.mxu0 0.0
      %2297 = vmatprep.subr.mxu0 0.0
      %2298 = vmatpush1.msra.mxu0 0.0
      %2299 = vmatprep.subr.mxu0 0.0
      %2300 = vmatpush1.msra.mxu0 0.0
      %2301 = vmatprep.subr.mxu0 0.0
      %2302 = vmatpush1.msra.mxu0 0.0
      %2303 = vmatprep.subr.mxu0 0.0
      %2304 = vmatpush1.msra.mxu0 0.0
      %2305 = vmatprep.subr.mxu0 0.0
      %2306 = vmatpush1.msra.mxu0 0.0
      %2307 = vmatprep.subr.mxu0 0.0
      %2308 = vmatpush1.msra.mxu0 0.0
      %2309 = vmatprep.subr.mxu0 0.0
      %2310 = vmatpush1.msra.mxu0 0.0
      %2311 = vmatprep.subr.mxu0 0.0
      %2312 = vmatpush1.msra.mxu0 0.0
      %2313 = vmatprep.subr.mxu0 0.0
      %2314 = vmatpush1.msra.mxu0 0.0
      %2315 = vmatprep.subr.mxu0 0.0
      %2316 = vmatpush1.msra.mxu0 0.0
      %2317 = vmatprep.subr.mxu0 0.0
      %2318 = vmatpush1.msra.mxu0 0.0
      %2319 = vmatprep.subr.mxu0 0.0
      %2320 = vmatpush1.msra.mxu0 0.0
      %2321 = vmatprep.mubr.f32.mxu0 0.0
      %2322 = vmatmul.mubr.f32.gmra.mrb[0].mxu0 %v2252
      %v2323 = vpop.f32.mrb[0].mxu0
      %v2324 = vadd.f32 0.0, %v2323
      %v2325 = vpop.f32.mrb[0].mxu0
      %2326 = vdwg.mxu0
      %s2327 = scalar_lea.vmem [#allocation3], 3
      %v2328 = vld [vmem:[%s2327] ss:$8 sm:$0xf]
      %v2329 = vld [vmem:[%s2327] ss:$8 sm:$0xf0]
      %v2330 = vor.u32 %v2328, %v2329
      %2331 = vrot.lane.b32.xlu0 %v2238, 20
      %v2332 = vpop.permute.xlu0 %2331
      %2335 = vrot.lane.b32.xlu0 %v2330, 40
      %v2336 = vpop.permute.xlu0 %2335
      %v2338 = vsel %vm2203, %v2234, %v2332
      %v2339 = vsel %vm2248, %v2338, %v2336
      %v2341 = vsel %vm2250, %v2339, 0
      %2343 = vmatprep.subr.mxu0 0.0
      %2344 = vmatpush1.msra.mxu0 %v2213
      %2345 = vmatprep.subr.mxu0 0.0
      %2346 = vmatpush1.msra.mxu0 %v2214
      %2347 = vmatprep.subr.mxu0 0.0
      %2348 = vmatpush1.msra.mxu0 %v2215
      %2349 = vmatprep.subr.mxu0 0.0
      %2350 = vmatpush1.msra.mxu0 %v2216
      %2351 = vmatprep.subr.mxu0 0.0
      %2352 = vmatpush1.msra.mxu0 %v2217
      %2353 = vmatprep.subr.mxu0 0.0
      %2354 = vmatpush1.msra.mxu0 %v2218
      %2355 = vmatprep.subr.mxu0 0.0
      %2356 = vmatpush1.msra.mxu0 %v2219
      %2357 = vmatprep.subr.mxu0 0.0
      %2358 = vmatpush1.msra.mxu0 %v2255
      %2359 = vmatprep.subr.mxu0 0.0
      %2360 = vmatpush1.msra.mxu0 0.0
      %2361 = vmatprep.subr.mxu0 0.0
      %2362 = vmatpush1.msra.mxu0 0.0
      %2363 = vmatprep.subr.mxu0 0.0
      %2364 = vmatpush1.msra.mxu0 0.0
      %2365 = vmatprep.subr.mxu0 0.0
      %2366 = vmatpush1.msra.mxu0 0.0
      %2367 = vmatprep.subr.mxu0 0.0
      %2368 = vmatpush1.msra.mxu0 0.0
      %2369 = vmatprep.subr.mxu0 0.0
      %2370 = vmatpush1.msra.mxu0 0.0
      %2371 = vmatprep.subr.mxu0 0.0
      %2372 = vmatpush1.msra.mxu0 0.0
      %2373 = vmatprep.subr.mxu0 0.0
      %2374 = vmatpush1.msra.mxu0 0.0
      %2375 = vmatprep.subr.mxu0 0.0
      %2376 = vmatpush1.msra.mxu0 0.0
      %2377 = vmatprep.subr.mxu0 0.0
      %2378 = vmatpush1.msra.mxu0 0.0
      %2379 = vmatprep.subr.mxu0 0.0
      %2380 = vmatpush1.msra.mxu0 0.0
      %2381 = vmatprep.subr.mxu0 0.0
      %2382 = vmatpush1.msra.mxu0 0.0
      %2383 = vmatprep.subr.mxu0 0.0
      %2384 = vmatpush1.msra.mxu0 0.0
      %2385 = vmatprep.subr.mxu0 0.0
      %2386 = vmatpush1.msra.mxu0 0.0
      %2387 = vmatprep.subr.mxu0 0.0
      %2388 = vmatpush1.msra.mxu0 0.0
      %2389 = vmatprep.subr.mxu0 0.0
      %2390 = vmatpush1.msra.mxu0 0.0
      %2391 = vmatprep.subr.mxu0 0.0
      %2392 = vmatpush1.msra.mxu0 0.0
      %2393 = vmatprep.subr.mxu0 0.0
      %2394 = vmatpush1.msra.mxu0 0.0
      %2395 = vmatprep.subr.mxu0 0.0
      %2396 = vmatpush1.msra.mxu0 0.0
      %2397 = vmatprep.subr.mxu0 0.0
      %2398 = vmatpush1.msra.mxu0 0.0
      %2399 = vmatprep.subr.mxu0 0.0
      %2400 = vmatpush1.msra.mxu0 0.0
      %2401 = vmatprep.subr.mxu0 0.0
      %2402 = vmatpush1.msra.mxu0 0.0
      %2403 = vmatprep.subr.mxu0 0.0
      %2404 = vmatpush1.msra.mxu0 0.0
      %2405 = vmatprep.subr.mxu0 0.0
      %2406 = vmatpush1.msra.mxu0 0.0
      %2407 = vmatprep.mubr.f32.mxu0 0.0
      %2408 = vmatmul.mubr.f32.gmra.mrb[0].mxu0 %v2341
      %v2409 = vpop.f32.mrb[0].mxu0
      %v2410 = vadd.f32 0.0, %v2409
      %v2411 = vpop.f32.mrb[0].mxu0
      %2412 = vdwg.mxu0
      %v2413 = vmax.f32 %v2324, %v2410
      %v2414 = vlaneseq
      %v2415 = vshrl.u32 %v2414, 7
      %v2416 = vsub.s32 0, %v2415
      %v2417 = vrot.slane %v2221, %v2416
      %v2418 = vadd.f32 %v2413, %v2417
      %v2419 = vmax.f32 %v2418, 0.0
      %vm2420 = vcmask 195584
      %v2422 = vsel %vm2420, %v2419, 0
      %2424 = vmatprep.subr.mxu0 0.0
      %2425 = vmatpush1.msra.mxu0 %v2222
      %2426 = vmatprep.subr.mxu0 0.0
      %2427 = vmatpush1.msra.mxu0 %v2223
      %2428 = vmatprep.subr.mxu0 0.0
      %2429 = vmatpush1.msra.mxu0 %v2224
      %2430 = vmatprep.subr.mxu0 0.0
      %2431 = vmatpush1.msra.mxu0 0.0
      %2432 = vmatprep.subr.mxu0 0.0
      %2433 = vmatpush1.msra.mxu0 0.0
      %2434 = vmatprep.subr.mxu0 0.0
      %2435 = vmatpush1.msra.mxu0 0.0
      %2436 = vmatprep.subr.mxu0 0.0
      %2437 = vmatpush1.msra.mxu0 0.0
      %2438 = vmatprep.subr.mxu0 0.0
      %2439 = vmatpush1.msra.mxu0 0.0
      %2440 = vmatprep.subr.mxu0 0.0
      %2441 = vmatpush1.msra.mxu0 0.0
      %2442 = vmatprep.subr.mxu0 0.0
      %2443 = vmatpush1.msra.mxu0 0.0
      %2444 = vmatprep.subr.mxu0 0.0
      %2445 = vmatpush1.msra.mxu0 0.0
      %2446 = vmatprep.subr.mxu0 0.0
      %2447 = vmatpush1.msra.mxu0 0.0
      %2448 = vmatprep.subr.mxu0 0.0
      %2449 = vmatpush1.msra.mxu0 0.0
      %2450 = vmatprep.subr.mxu0 0.0
      %2451 = vmatpush1.msra.mxu0 0.0
      %2452 = vmatprep.subr.mxu0 0.0
      %2453 = vmatpush1.msra.mxu0 0.0
      %2454 = vmatprep.subr.mxu0 0.0
      %2455 = vmatpush1.msra.mxu0 0.0
      %2456 = vmatprep.subr.mxu0 0.0
      %2457 = vmatpush1.msra.mxu0 0.0
      %2458 = vmatprep.subr.mxu0 0.0
      %2459 = vmatpush1.msra.mxu0 0.0
      %2460 = vmatprep.subr.mxu0 0.0
      %2461 = vmatpush1.msra.mxu0 0.0
      %2462 = vmatprep.subr.mxu0 0.0
      %2463 = vmatpush1.msra.mxu0 0.0
      %2464 = vmatprep.subr.mxu0 0.0
      %2465 = vmatpush1.msra.mxu0 0.0
      %2466 = vmatprep.subr.mxu0 0.0
      %2467 = vmatpush1.msra.mxu0 0.0
      %2468 = vmatprep.subr.mxu0 0.0
      %2469 = vmatpush1.msra.mxu0 0.0
      %2470 = vmatprep.subr.mxu0 0.0
      %2471 = vmatpush1.msra.mxu0 0.0
      %2472 = vmatprep.subr.mxu0 0.0
      %2473 = vmatpush1.msra.mxu0 0.0
      %2474 = vmatprep.subr.mxu0 0.0
      %2475 = vmatpush1.msra.mxu0 0.0
      %2476 = vmatprep.subr.mxu0 0.0
      %2477 = vmatpush1.msra.mxu0 0.0
      %2478 = vmatprep.subr.mxu0 0.0
      %2479 = vmatpush1.msra.mxu0 0.0
      %2480 = vmatprep.subr.mxu0 0.0
      %2481 = vmatpush1.msra.mxu0 0.0
      %2482 = vmatprep.subr.mxu0 0.0
      %2483 = vmatpush1.msra.mxu0 0.0
      %2484 = vmatprep.subr.mxu0 0.0
      %2485 = vmatpush1.msra.mxu0 0.0
      %2486 = vmatprep.subr.mxu0 0.0
      %2487 = vmatpush1.msra.mxu0 0.0
      %2488 = vmatprep.mubr.f32.mxu0 0.0
      %2489 = vmatmul.mubr.f32.gmra.mrb[0].mxu0 %v2422
      %v2490 = vpop.f32.mrb[0].mxu0
      %v2491 = vadd.f32 0.0, %v2490
      %v2492 = vpop.f32.mrb[0].mxu0
      %2493 = vdwg.mxu0
      %2494 = vmatprep.subr.mxu0 0.0
      %2495 = vmatpush1.msra.mxu0 %v2225
      %2496 = vmatprep.subr.mxu0 0.0
      %2497 = vmatpush1.msra.mxu0 %v2226
      %2498 = vmatprep.subr.mxu0 0.0
      %2499 = vmatpush1.msra.mxu0 %v2227
      %2500 = vmatprep.subr.mxu0 0.0
      %2501 = vmatpush1.msra.mxu0 0.0
      %2502 = vmatprep.subr.mxu0 0.0
      %2503 = vmatpush1.msra.mxu0 0.0
      %2504 = vmatprep.subr.mxu0 0.0
      %2505 = vmatpush1.msra.mxu0 0.0
      %2506 = vmatprep.subr.mxu0 0.0
      %2507 = vmatpush1.msra.mxu0 0.0
      %2508 = vmatprep.subr.mxu0 0.0
      %2509 = vmatpush1.msra.mxu0 0.0
      %2510 = vmatprep.subr.mxu0 0.0
      %2511 = vmatpush1.msra.mxu0 0.0
      %2512 = vmatprep.subr.mxu0 0.0
      %2513 = vmatpush1.msra.mxu0 0.0
      %2514 = vmatprep.subr.mxu0 0.0
      %2515 = vmatpush1.msra.mxu0 0.0
      %2516 = vmatprep.subr.mxu0 0.0
      %2517 = vmatpush1.msra.mxu0 0.0
      %2518 = vmatprep.subr.mxu0 0.0
      %2519 = vmatpush1.msra.mxu0 0.0
      %2520 = vmatprep.subr.mxu0 0.0
      %2521 = vmatpush1.msra.mxu0 0.0
      %2522 = vmatprep.subr.mxu0 0.0
      %2523 = vmatpush1.msra.mxu0 0.0
      %2524 = vmatprep.subr.mxu0 0.0
      %2525 = vmatpush1.msra.mxu0 0.0
      %2526 = vmatprep.subr.mxu0 0.0
      %2527 = vmatpush1.msra.mxu0 0.0
      %2528 = vmatprep.subr.mxu0 0.0
      %2529 = vmatpush1.msra.mxu0 0.0
      %2530 = vmatprep.subr.mxu0 0.0
      %2531 = vmatpush1.msra.mxu0 0.0
      %2532 = vmatprep.subr.mxu0 0.0
      %2533 = vmatpush1.msra.mxu0 0.0
      %2534 = vmatprep.subr.mxu0 0.0
      %2535 = vmatpush1.msra.mxu0 0.0
      %2536 = vmatprep.subr.mxu0 0.0
      %2537 = vmatpush1.msra.mxu0 0.0
      %2538 = vmatprep.subr.mxu0 0.0
      %2539 = vmatpush1.msra.mxu0 0.0
      %2540 = vmatprep.subr.mxu0 0.0
      %2541 = vmatpush1.msra.mxu0 0.0
      %2542 = vmatprep.subr.mxu0 0.0
      %2543 = vmatpush1.msra.mxu0 0.0
      %2544 = vmatprep.subr.mxu0 0.0
      %2545 = vmatpush1.msra.mxu0 0.0
      %2546 = vmatprep.subr.mxu0 0.0
      %2547 = vmatpush1.msra.mxu0 0.0
      %2548 = vmatprep.subr.mxu0 0.0
      %2549 = vmatpush1.msra.mxu0 0.0
      %2550 = vmatprep.subr.mxu0 0.0
      %2551 = vmatpush1.msra.mxu0 0.0
      %2552 = vmatprep.subr.mxu0 0.0
      %2553 = vmatpush1.msra.mxu0 0.0
      %2554 = vmatprep.subr.mxu0 0.0
      %2555 = vmatpush1.msra.mxu0 0.0
      %2556 = vmatprep.subr.mxu0 0.0
      %2557 = vmatpush1.msra.mxu0 0.0
      %2558 = vmatprep.mubr.f32.mxu0 0.0
      %2559 = vmatmul.mubr.f32.gmra.mrb[0].mxu0 %v2422
      %v2560 = vpop.f32.mrb[0].mxu0
      %v2561 = vadd.f32 0.0, %v2560
      %v2562 = vpop.f32.mrb[0].mxu0
      %2563 = vdwg.mxu0
      %v2564 = vmax.f32 %v2491, %v2561
      %v2565 = vld [vmem:[%s1 + $0x200] sm:$0xff]
      %v2566 = vld [vmem:[%s1 + $0x208] sm:$0x1]
      %v2567 = vlaneseq
      %v2568 = vshrl.u32 %v2567, 7
      %v2569 = vsub.s32 0, %v2568
      %v2570 = vrot.slane %v2566, %v2569
      %vm2571 = vcmask 64512
      %v2573 = vsel %vm2571, %v2564, 0
      %2575 = vmatprep.subr.mxu0 0.0
      %2576 = vmatpush1.msra.mxu0 %v2565
      %2577 = vmatprep.subr.mxu0 0.0
      %2578 = vmatpush1.msra.mxu0 0.0
      %2579 = vmatprep.subr.mxu0 0.0
      %2580 = vmatpush1.msra.mxu0 0.0
      %2581 = vmatprep.subr.mxu0 0.0
      %2582 = vmatpush1.msra.mxu0 0.0
      %2583 = vmatprep.subr.mxu0 0.0
      %2584 = vmatpush1.msra.mxu0 0.0
      %2585 = vmatprep.subr.mxu0 0.0
      %2586 = vmatpush1.msra.mxu0 0.0
      %2587 = vmatprep.subr.mxu0 0.0
      %2588 = vmatpush1.msra.mxu0 0.0
      %2589 = vmatprep.subr.mxu0 0.0
      %2590 = vmatpush1.msra.mxu0 0.0
      %2591 = vmatprep.subr.mxu0 0.0
      %2592 = vmatpush1.msra.mxu0 0.0
      %2593 = vmatprep.subr.mxu0 0.0
      %2594 = vmatpush1.msra.mxu0 0.0
      %2595 = vmatprep.subr.mxu0 0.0
      %2596 = vmatpush1.msra.mxu0 0.0
      %2597 = vmatprep.subr.mxu0 0.0
      %2598 = vmatpush1.msra.mxu0 0.0
      %2599 = vmatprep.subr.mxu0 0.0
      %2600 = vmatpush1.msra.mxu0 0.0
      %2601 = vmatprep.subr.mxu0 0.0
      %2602 = vmatpush1.msra.mxu0 0.0
      %2603 = vmatprep.subr.mxu0 0.0
      %2604 = vmatpush1.msra.mxu0 0.0
      %2605 = vmatprep.subr.mxu0 0.0
      %2606 = vmatpush1.msra.mxu0 0.0
      %2607 = vmatprep.subr.mxu0 0.0
      %2608 = vmatpush1.msra.mxu0 0.0
      %2609 = vmatprep.subr.mxu0 0.0
      %2610 = vmatpush1.msra.mxu0 0.0
      %2611 = vmatprep.subr.mxu0 0.0
      %2612 = vmatpush1.msra.mxu0 0.0
      %2613 = vmatprep.subr.mxu0 0.0
      %2614 = vmatpush1.msra.mxu0 0.0
      %2615 = vmatprep.subr.mxu0 0.0
      %2616 = vmatpush1.msra.mxu0 0.0
      %2617 = vmatprep.subr.mxu0 0.0
      %2618 = vmatpush1.msra.mxu0 0.0
      %2619 = vmatprep.subr.mxu0 0.0
      %2620 = vmatpush1.msra.mxu0 0.0
      %2621 = vmatprep.subr.mxu0 0.0
      %2622 = vmatpush1.msra.mxu0 0.0
      %2623 = vmatprep.subr.mxu0 0.0
      %2624 = vmatpush1.msra.mxu0 0.0
      %2625 = vmatprep.subr.mxu0 0.0
      %2626 = vmatpush1.msra.mxu0 0.0
      %2627 = vmatprep.subr.mxu0 0.0
      %2628 = vmatpush1.msra.mxu0 0.0
      %2629 = vmatprep.subr.mxu0 0.0
      %2630 = vmatpush1.msra.mxu0 0.0
      %2631 = vmatprep.subr.mxu0 0.0
      %2632 = vmatpush1.msra.mxu0 0.0
      %2633 = vmatprep.subr.mxu0 0.0
      %2634 = vmatpush1.msra.mxu0 0.0
      %2635 = vmatprep.subr.mxu0 0.0
      %2636 = vmatpush1.msra.mxu0 0.0
      %2637 = vmatprep.subr.mxu0 0.0
      %2638 = vmatpush1.msra.mxu0 0.0
      %2639 = vmatprep.mubr.f32.mxu0 0.0
      %2640 = vmatmul.mubr.f32.gmra.mrb[0].mxu0 %v2573
      %v2641 = vpop.f32.mrb[0].mxu0
      %v2642 = vadd.f32 %v2570, %v2641
      %v2643 = vpop.f32.mrb[0].mxu0
      %2644 = vdwg.mxu0
      %vm2645 = vcmask 15360
      %2646 = vst.msk [vmem:[%s143] sm:$0xff] %vm2645, %v2642
      %p2647 = scmp.lt.s32.totalorder %s13, 1
      %s2648 = scalar_select %p2647, %s13, 1
      %s2649 = smul.addr %s2648, 8
      %s2650 = scalar_lea.vmem %s2, %s2649
      // Predicated region
      $region29: #{synth_classifier_forward.1} parent=27 // pred_check
        %p2651 = pneg %p78
      $region30: #{synth_classifier_forward.1} parent=27 // pred_check_branch
        %2653 = sbr.rel (%p2651) target = $region32
      $region31: #{synth_classifier_forward.1} parent=27 // pred_region
        _
      $region32: #{synth_classifier_forward.1} parent=27 // pred_fallthru
        _
    $region28: #{synth_classifier_forward.1} parent=5 // pred_fallthru
      _
    %p2654 = scmp.le.s32.totalorder 2, %s8
    // Predicated region
    $region33: #{synth_classifier_forward.1} parent=5 // pred_check
      %p2655 = pneg %p2654
    $region34: #{synth_classifier_forward.1} parent=5 // pred_check_branch
      %2657 = sbr.rel (%p2655) target = $region36
    $region35: #{synth_classifier_forward.1} parent=5 // pred_region
      %s2658 = ssub.s32 %s8, 2
      // Predicated region
      $region37: #{synth_classifier_forward.1} parent=35 // pred_check
        %p2659 = pneg %p84
      $region38: #{synth_classifier_forward.1} parent=35 // pred_check_branch
        %2661 = sbr.rel (%p2659) target = $region40
      $region39: #{synth_classifier_forward.1} parent=35 // pred_region
        %p2662 = scmp.lt.s32.totalorder %s14, 1
        %s2663 = scalar_select %p2662, %s14, 1
        %s2664 = smul.addr %s2663, 8
        %s2665 = scalar_lea.vmem %s2, %s2664
      $region40: #{synth_classifier_forward.1} parent=35 // pred_fallthru
        _
    $region36: #{synth_classifier_forward.1} parent=5 // pred_fallthru
      _
  $region6: #{synth_classifier_forward.1} parent=0 // loop_footer
    %s12 = sadd.s32 1, %s8
  $region7: #{synth_classifier_forward.1} parent=0 // loop_footer_branch
    %7 = sbr.rel target = $region3
  $region8: #{synth_classifier_forward.1} parent=0 // loop_exit
    _

</llo_original>
